<compile_context>
chip_gen: v7x
topology: tpu7x:2x2x1
jax: 0.10.0
libtpu: 0.0.40
codegen_flags: <defaults>
</compile_context>

<pallas_src>
import math

import jax
import jax.numpy as jnp
from jax.experimental import pallas as pl
from jax.experimental.pallas import tpu as pltpu


# ----------------------------------------------------------------------------
# Pallas kernel: one (batch, H-tile) per grid step.
#   xb_ref   : (1, TH, W+2, Cp)   bulk rows of the padded NHWC input tile (f32)
#   xhbm_ref : (N, H+2, W+2, Cp)  full padded input, left in HBM (halo source)
#   wdw_ref  : (3, 3, Cp)         depthwise weights (f32)
#   wpw_ref  : (Cp, Coutp)        folded pointwise weights (bf16)
#   beff_ref : (1, Coutp)         folded pointwise bias (f32)
#   o_ref    : (1, TH, W, Coutp)  output tile (f32)
#   halo_ref : (2, W+2, Cp)       VMEM scratch for the 2-row bottom halo
#   dma_sem  : DMA semaphore
# ----------------------------------------------------------------------------
def _sepconv_kernel(xb_ref, xhbm_ref, wdw_ref, wpw_ref, beff_ref,
                    o_ref, halo_ref, dma_sem):
    n = pl.program_id(0)
    h = pl.program_id(1)
    TH = o_ref.shape[1]
    W = o_ref.shape[2]
    Coutp = o_ref.shape[3]
    Cp = xb_ref.shape[3]

    # Kick off the tiny 2-row bottom-halo fetch (padded rows
    # [(h+1)*TH, (h+1)*TH + 2)) while the bulk-only taps run.
    halo_cp = pltpu.make_async_copy(
        xhbm_ref.at[n, pl.ds((h + 1) * TH, 2)], halo_ref, dma_sem)
    halo_cp.start()

    xb = xb_ref[0]                                        # (TH, W+2, Cp) f32

    # Only 3 sublane-shifted (kw) cuts of the bulk tile; the kh indexing below
    # is along the untiled leading axis (cheap).
    xb_k = (xb[:, 0:W, :], xb[:, 1:W + 1, :], xb[:, 2:W + 2, :])

    # kh == 0 taps need only the bulk rows; init acc from the first tap.
    acc = xb_k[0] * wdw_ref[0, 0, :]
    acc = acc + xb_k[1] * wdw_ref[0, 1, :]
    acc = acc + xb_k[2] * wdw_ref[0, 2, :]

    halo_cp.wait()
    xh = halo_ref[...]                                    # (2, W+2, Cp) f32
    xh_k = (xh[:, 0:W, :], xh[:, 1:W + 1, :], xh[:, 2:W + 2, :])

    for kh in (1, 2):
        for kw in range(3):
            xs = jnp.concatenate([xb_k[kw][kh:], xh_k[kw][:kh]], axis=0)
            acc = acc + xs * wdw_ref[kh, kw, :]

    # Pointwise 1x1 conv on the MXU (bf16 operands, f32 accumulation).
    # Depthwise-BN and pointwise-BN are folded into wpw_ref / beff_ref.
    y = jnp.dot(acc.reshape(TH * W, Cp).astype(jnp.bfloat16), wpw_ref[...],
                preferred_element_type=jnp.float32)       # (TH*W, Coutp)
    y = jnp.maximum(y + beff_ref[0], 0.0)
    o_ref[0] = y.reshape(TH, W, Coutp).astype(o_ref.dtype)


# ----------------------------------------------------------------------------
# Wrapper: BN folding, channel padding, tiling, pallas_call.
# ----------------------------------------------------------------------------
def _round_up(x, m):
    return (x + m - 1) // m * m


def _pick_th(H, W, Cp, Coutp, budget_bytes=8 << 20):
    """Largest divisor of H whose (double-buffered in+out + halo) tile fits the
    budget; sized conservatively so it works on v5e/v6e (32/128 MiB scoped) and
    v7x (64 MiB physical VMEM)."""
    divisors = [d for d in range(2, H + 1) if H % d == 0] or [H]
    best = divisors[0]
    for d in divisors:
        tile_bytes = 8 * d * ((W + 2) * Cp + W * Coutp) + 8 * (W + 2) * Cp
        if tile_bytes <= budget_bytes:
            best = d
    return best


def seperable_conv2d(x_nchw, params, eps=1e-5, th=None):
    """x_nchw: (N, C, H, W) float32. Returns (N, Cout, H, W) float32."""
    w_dw = params["dw_weight"]        # (C, 1, 3, 3)   PyTorch OIHW, groups=C
    w_pw = params["pw_weight"]        # (Cout, C, 1, 1)

    N, C, H, W = x_nchw.shape
    Cout = w_pw.shape[0]
    Cp = _round_up(C, 128)            # lane-dense channel padding
    Coutp = _round_up(Cout, 128)

    # Fold BN (eval mode) into per-channel scale/shift.
    dw_scale = params["dw_bn_gamma"] / jnp.sqrt(params["dw_bn_var"] + eps)
    dw_shift = params["dw_bn_beta"] - params["dw_bn_mean"] * dw_scale
    pw_scale = params["pw_bn_gamma"] / jnp.sqrt(params["pw_bn_var"] + eps)
    pw_shift = params["pw_bn_beta"] - params["pw_bn_mean"] * pw_scale

    # Fold dw-BN and pw-BN scale into the pointwise weights, shifts into bias:
    #   y = relu(acc @ W_eff + b_eff)
    wpw = jnp.transpose(w_pw[:, :, 0, 0], (1, 0))                 # (C, Cout)
    w_eff = dw_scale[:, None] * wpw * pw_scale[None, :]           # (C, Cout)
    b_eff = (dw_shift @ wpw) * pw_scale + pw_shift                # (Cout,)

    w_eff = jnp.pad(w_eff, ((0, Cp - C), (0, Coutp - Cout))).astype(jnp.bfloat16)
    b_eff = jnp.pad(b_eff, (0, Coutp - Cout)).reshape(1, Coutp).astype(jnp.float32)

    wdw = jnp.transpose(w_dw[:, 0, :, :], (1, 2, 0))              # (3, 3, C)
    wdw = jnp.pad(wdw, ((0, 0), (0, 0), (0, Cp - C))).astype(jnp.float32)

    # NCHW -> NHWC, spatial pad by 1 (3x3 conv, padding=1), channels to Cp.
    x = jnp.transpose(x_nchw, (0, 2, 3, 1)).astype(jnp.float32)
    xp = jnp.pad(x, ((0, 0), (1, 1), (1, 1), (0, Cp - C)))        # (N,H+2,W+2,Cp)

    if th is None:
        th = _pick_th(H, W, Cp, Coutp)
    assert H % th == 0 and th >= 2, (H, th)
    nh = H // th

    out_nhwc = pl.pallas_call(
        _sepconv_kernel,
        out_shape=jax.ShapeDtypeStruct((N, H, W, Coutp), jnp.float32),
        grid_spec=pltpu.PrefetchScalarGridSpec(
            num_scalar_prefetch=0,
            grid=(N, nh),
            in_specs=[
                # bulk TH rows of this tile, auto-pipelined
                pl.BlockSpec((1, th, W + 2, Cp), lambda n, h: (n, h, 0, 0)),
                # same array left in HBM, source for the 2-row halo DMA
                pl.BlockSpec(memory_space=pl.ANY),
                pl.BlockSpec((3, 3, Cp), lambda n, h: (0, 0, 0)),
                pl.BlockSpec((Cp, Coutp), lambda n, h: (0, 0)),
                pl.BlockSpec((1, Coutp), lambda n, h: (0, 0)),
            ],
            out_specs=pl.BlockSpec((1, th, W, Coutp), lambda n, h: (n, h, 0, 0)),
            scratch_shapes=[
                pltpu.VMEM((2, W + 2, Cp), jnp.float32),
                pltpu.SemaphoreType.DMA,
            ],
        ),
        compiler_params=pltpu.CompilerParams(
            dimension_semantics=("parallel", "parallel")),
    )(xp, xp, wdw, w_eff, b_eff)

    # Drop padded output channels, back to NCHW.
    return jnp.transpose(out_nhwc[..., :Cout], (0, 3, 1, 2))


# ----------------------------------------------------------------------------
# Deterministic parameter construction (mirrors the module's __init__).
# ----------------------------------------------------------------------------
def init_params(key, in_channel, out_channel, kernel_size=3):
    k_dw, k_pw = jax.random.split(key)

    # Conv weight init: normal(0, sqrt(2 / (k*k*out_channels)))
    n_dw = kernel_size * kernel_size * in_channel          # depthwise: out=C
    n_pw = 1 * 1 * out_channel                              # pointwise 1x1
    dw_weight = jax.random.normal(
        k_dw, (in_channel, 1, kernel_size, kernel_size), jnp.float32
    ) * math.sqrt(2.0 / n_dw)
    pw_weight = jax.random.normal(
        k_pw, (out_channel, in_channel, 1, 1), jnp.float32
    ) * math.sqrt(2.0 / n_pw)

    return dict(
        dw_weight=dw_weight,
        pw_weight=pw_weight,
        dw_bn_gamma=jnp.ones((in_channel,), jnp.float32),
        dw_bn_beta=jnp.zeros((in_channel,), jnp.float32),
        dw_bn_mean=jnp.zeros((in_channel,), jnp.float32),
        dw_bn_var=jnp.ones((in_channel,), jnp.float32),
        pw_bn_gamma=jnp.ones((out_channel,), jnp.float32),
        pw_bn_beta=jnp.zeros((out_channel,), jnp.float32),
        pw_bn_mean=jnp.zeros((out_channel,), jnp.float32),
        pw_bn_var=jnp.ones((out_channel,), jnp.float32),
    )


# ----------------------------------------------------------------------------
# Pure-JAX reference (sanity check) using lax conv primitives.
# ----------------------------------------------------------------------------
def reference_forward(x_nchw, params, eps=1e-5):
    C = x_nchw.shape[1]
    dw = jax.lax.conv_general_dilated(
        x_nchw, params["dw_weight"], window_strides=(1, 1), padding="SAME",
        dimension_numbers=("NCHW", "OIHW", "NCHW"), feature_group_count=C)
    scale = params["dw_bn_gamma"] / jnp.sqrt(params["dw_bn_var"] + eps)
    shift = params["dw_bn_beta"] - params["dw_bn_mean"] * scale
    dw = dw * scale[None, :, None, None] + shift[None, :, None, None]

    pw = jax.lax.conv_general_dilated(
        dw, params["pw_weight"], window_strides=(1, 1), padding="VALID",
        dimension_numbers=("NCHW", "OIHW", "NCHW"))
    scale = params["pw_bn_gamma"] / jnp.sqrt(params["pw_bn_var"] + eps)
    shift = params["pw_bn_beta"] - params["pw_bn_mean"] * scale
    pw = pw * scale[None, :, None, None] + shift[None, :, None, None]
    return jnp.maximum(pw, 0.0)


if __name__ == "__main__":
    key = jax.random.PRNGKey(0)
    k_params, k_x = jax.random.split(key)

    N, C_in, C_out, H, W = 2, 4, 8, 16, 16
    params = init_params(k_params, C_in, C_out)
    x = jax.random.normal(k_x, (N, C_in, H, W), jnp.float32)

    # th=8 forces 2 spatial tiles per image so the interior-halo path is hit.
    out = seperable_conv2d(x, params, th=8)
    out = jax.block_until_ready(out)

    ref = jax.block_until_ready(reference_forward(x, params))
    assert out.shape == (N, C_out, H, W)
    # bf16 MXU operands => loosened tolerance vs the f32 lax reference.
    assert jnp.allclose(out, ref, atol=5e-2, rtol=5e-2), (
        float(jnp.max(jnp.abs(out - ref))))

    print("KERNEL_OK")
</pallas_src>

<mosaic_0001>
module attributes {stable_mosaic.version = 11 : i64} {
  func.func @_sepconv_kernel(%arg0: i32, %arg1: i32, %arg2: memref<1x8x18x128xf32, #tpu.memory_space<vmem>>, %arg3: memref<2x18x18x128xf32, #tpu.memory_space<any>>, %arg4: memref<3x3x128xf32, #tpu.memory_space<vmem>>, %arg5: memref<128x128xbf16, #tpu.memory_space<vmem>>, %arg6: memref<1x128xf32, #tpu.memory_space<vmem>>, %arg7: memref<1x8x16x128xf32, #tpu.memory_space<vmem>>, %arg8: memref<2x18x128xf32, #tpu.memory_space<vmem>>, %arg9: memref<!tpu.dma_semaphore, #tpu.memory_space<semaphore_mem>>) attributes {dimension_semantics = [#tpu.dimension_semantics<parallel>, #tpu.dimension_semantics<parallel>], iteration_bounds = array<i64: 2, 2>, scalar_prefetch = 0 : i64, scratch_operands = 2 : i64, tpu.core_type = #tpu.core_type<tc>, window_params = [{transform_indices = @transform_0, window_bounds = array<i64: 1, 8, 18, 128>}, {}, {pipeline_mode = #tpu.pipeline_mode<synchronous>, transform_indices = @transform_2, window_bounds = array<i64: 3, 3, 128>}, {pipeline_mode = #tpu.pipeline_mode<synchronous>, transform_indices = @transform_3, window_bounds = array<i64: 128, 128>}, {pipeline_mode = #tpu.pipeline_mode<synchronous>, transform_indices = @transform_4, window_bounds = array<i64: 1, 128>}, {transform_indices = @transform_5, window_bounds = array<i64: 1, 8, 16, 128>}]} {
    %c1_i32 = arith.constant 1 : i32
    %0 = arith.addi %arg1, %c1_i32 : i32
    %c8_i32 = arith.constant 8 : i32
    %1 = arith.muli %0, %c8_i32 : i32
    %c0_i32 = arith.constant 0 : i32
    %c0_i32_0 = arith.constant 0 : i32
    %2 = tpu.memref_slice %arg3[%arg0, %1, %c0_i32, %c0_i32_0] : memref<2x18x18x128xf32, #tpu.memory_space<any>> -> memref<1x2x18x128xf32, #tpu.memory_space<any>>
    %3 = tpu.memref_squeeze %2 : memref<1x2x18x128xf32, #tpu.memory_space<any>> -> memref<2x18x128xf32, #tpu.memory_space<any>>
    tpu.enqueue_dma source(%3 : memref<2x18x128xf32, #tpu.memory_space<any>>) target(%arg8 : memref<2x18x128xf32, #tpu.memory_space<vmem>>) target_semaphore(%arg9 : memref<!tpu.dma_semaphore, #tpu.memory_space<semaphore_mem>>)
    %c0 = arith.constant 0 : index
    %c0_1 = arith.constant 0 : index
    %c0_2 = arith.constant 0 : index
    %c0_3 = arith.constant 0 : index
    %4 = vector.load %arg2[%c0, %c0_1, %c0_2, %c0_3] : memref<1x8x18x128xf32, #tpu.memory_space<vmem>>, vector<1x8x18x128xf32>
    %5 = vector.shape_cast %4 : vector<1x8x18x128xf32> to vector<8x18x128xf32>
    %6 = vector.extract_strided_slice %5 {offsets = [0, 0, 0], sizes = [8, 16, 128], strides = [1, 1, 1]} : vector<8x18x128xf32> to vector<8x16x128xf32>
    %7 = vector.extract_strided_slice %5 {offsets = [0, 1, 0], sizes = [8, 16, 128], strides = [1, 1, 1]} : vector<8x18x128xf32> to vector<8x16x128xf32>
    %8 = vector.extract_strided_slice %5 {offsets = [0, 2, 0], sizes = [8, 16, 128], strides = [1, 1, 1]} : vector<8x18x128xf32> to vector<8x16x128xf32>
    %c0_4 = arith.constant 0 : index
    %c0_5 = arith.constant 0 : index
    %c0_6 = arith.constant 0 : index
    %9 = vector.load %arg4[%c0_4, %c0_5, %c0_6] : memref<3x3x128xf32, #tpu.memory_space<vmem>>, vector<1x1x128xf32>
    %10 = vector.shape_cast %9 : vector<1x1x128xf32> to vector<128xf32>
    %11 = vector.shape_cast %10 : vector<128xf32> to vector<1x1x128xf32>
    %12 = vector.broadcast %11 : vector<1x1x128xf32> to vector<8x16x128xf32>
    %13 = arith.mulf %6, %12 : vector<8x16x128xf32>
    %c0_7 = arith.constant 0 : index
    %c1 = arith.constant 1 : index
    %c0_8 = arith.constant 0 : index
    %14 = vector.load %arg4[%c0_7, %c1, %c0_8] : memref<3x3x128xf32, #tpu.memory_space<vmem>>, vector<1x1x128xf32>
    %15 = vector.shape_cast %14 : vector<1x1x128xf32> to vector<128xf32>
    %16 = vector.shape_cast %15 : vector<128xf32> to vector<1x1x128xf32>
    %17 = vector.broadcast %16 : vector<1x1x128xf32> to vector<8x16x128xf32>
    %18 = arith.mulf %7, %17 : vector<8x16x128xf32>
    %19 = arith.addf %13, %18 : vector<8x16x128xf32>
    %c0_9 = arith.constant 0 : index
    %c2 = arith.constant 2 : index
    %c0_10 = arith.constant 0 : index
    %20 = vector.load %arg4[%c0_9, %c2, %c0_10] : memref<3x3x128xf32, #tpu.memory_space<vmem>>, vector<1x1x128xf32>
    %21 = vector.shape_cast %20 : vector<1x1x128xf32> to vector<128xf32>
    %22 = vector.shape_cast %21 : vector<128xf32> to vector<1x1x128xf32>
    %23 = vector.broadcast %22 : vector<1x1x128xf32> to vector<8x16x128xf32>
    %24 = arith.mulf %8, %23 : vector<8x16x128xf32>
    %25 = arith.addf %19, %24 : vector<8x16x128xf32>
    %c0_i32_11 = arith.constant 0 : i32
    %c0_i32_12 = arith.constant 0 : i32
    %26 = tpu.memref_slice %arg3[%arg0, %1, %c0_i32_11, %c0_i32_12] : memref<2x18x18x128xf32, #tpu.memory_space<any>> -> memref<1x2x18x128xf32, #tpu.memory_space<any>>
    %27 = tpu.memref_squeeze %26 : memref<1x2x18x128xf32, #tpu.memory_space<any>> -> memref<2x18x128xf32, #tpu.memory_space<any>>
    tpu.wait_dma2 semaphore(%arg9 : memref<!tpu.dma_semaphore, #tpu.memory_space<semaphore_mem>>) src(%27 : memref<2x18x128xf32, #tpu.memory_space<any>>) dst(%arg8 : memref<2x18x128xf32, #tpu.memory_space<vmem>>)
    %c0_13 = arith.constant 0 : index
    %c0_14 = arith.constant 0 : index
    %c0_15 = arith.constant 0 : index
    %28 = vector.load %arg8[%c0_13, %c0_14, %c0_15] : memref<2x18x128xf32, #tpu.memory_space<vmem>>, vector<2x18x128xf32>
    %29 = vector.extract_strided_slice %28 {offsets = [0, 0, 0], sizes = [2, 16, 128], strides = [1, 1, 1]} : vector<2x18x128xf32> to vector<2x16x128xf32>
    %30 = vector.extract_strided_slice %28 {offsets = [0, 1, 0], sizes = [2, 16, 128], strides = [1, 1, 1]} : vector<2x18x128xf32> to vector<2x16x128xf32>
    %31 = vector.extract_strided_slice %28 {offsets = [0, 2, 0], sizes = [2, 16, 128], strides = [1, 1, 1]} : vector<2x18x128xf32> to vector<2x16x128xf32>
    %32 = vector.extract_strided_slice %6 {offsets = [1, 0, 0], sizes = [7, 16, 128], strides = [1, 1, 1]} : vector<8x16x128xf32> to vector<7x16x128xf32>
    %33 = vector.extract_strided_slice %29 {offsets = [0, 0, 0], sizes = [1, 16, 128], strides = [1, 1, 1]} : vector<2x16x128xf32> to vector<1x16x128xf32>
    %34 = tpu.concatenate %32, %33 in 0 : vector<7x16x128xf32>, vector<1x16x128xf32> -> vector<8x16x128xf32>
    %c1_16 = arith.constant 1 : index
    %c0_17 = arith.constant 0 : index
    %c0_18 = arith.constant 0 : index
    %35 = vector.load %arg4[%c1_16, %c0_17, %c0_18] : memref<3x3x128xf32, #tpu.memory_space<vmem>>, vector<1x1x128xf32>
    %36 = vector.shape_cast %35 : vector<1x1x128xf32> to vector<128xf32>
    %37 = vector.shape_cast %36 : vector<128xf32> to vector<1x1x128xf32>
    %38 = vector.broadcast %37 : vector<1x1x128xf32> to vector<8x16x128xf32>
    %39 = arith.mulf %34, %38 : vector<8x16x128xf32>
    %40 = arith.addf %25, %39 : vector<8x16x128xf32>
    %41 = vector.extract_strided_slice %7 {offsets = [1, 0, 0], sizes = [7, 16, 128], strides = [1, 1, 1]} : vector<8x16x128xf32> to vector<7x16x128xf32>
    %42 = vector.extract_strided_slice %30 {offsets = [0, 0, 0], sizes = [1, 16, 128], strides = [1, 1, 1]} : vector<2x16x128xf32> to vector<1x16x128xf32>
    %43 = tpu.concatenate %41, %42 in 0 : vector<7x16x128xf32>, vector<1x16x128xf32> -> vector<8x16x128xf32>
    %c1_19 = arith.constant 1 : index
    %c1_20 = arith.constant 1 : index
    %c0_21 = arith.constant 0 : index
    %44 = vector.load %arg4[%c1_19, %c1_20, %c0_21] : memref<3x3x128xf32, #tpu.memory_space<vmem>>, vector<1x1x128xf32>
    %45 = vector.shape_cast %44 : vector<1x1x128xf32> to vector<128xf32>
    %46 = vector.shape_cast %45 : vector<128xf32> to vector<1x1x128xf32>
    %47 = vector.broadcast %46 : vector<1x1x128xf32> to vector<8x16x128xf32>
    %48 = arith.mulf %43, %47 : vector<8x16x128xf32>
    %49 = arith.addf %40, %48 : vector<8x16x128xf32>
    %50 = vector.extract_strided_slice %8 {offsets = [1, 0, 0], sizes = [7, 16, 128], strides = [1, 1, 1]} : vector<8x16x128xf32> to vector<7x16x128xf32>
    %51 = vector.extract_strided_slice %31 {offsets = [0, 0, 0], sizes = [1, 16, 128], strides = [1, 1, 1]} : vector<2x16x128xf32> to vector<1x16x128xf32>
    %52 = tpu.concatenate %50, %51 in 0 : vector<7x16x128xf32>, vector<1x16x128xf32> -> vector<8x16x128xf32>
    %c1_22 = arith.constant 1 : index
    %c2_23 = arith.constant 2 : index
    %c0_24 = arith.constant 0 : index
    %53 = vector.load %arg4[%c1_22, %c2_23, %c0_24] : memref<3x3x128xf32, #tpu.memory_space<vmem>>, vector<1x1x128xf32>
    %54 = vector.shape_cast %53 : vector<1x1x128xf32> to vector<128xf32>
    %55 = vector.shape_cast %54 : vector<128xf32> to vector<1x1x128xf32>
    %56 = vector.broadcast %55 : vector<1x1x128xf32> to vector<8x16x128xf32>
    %57 = arith.mulf %52, %56 : vector<8x16x128xf32>
    %58 = arith.addf %49, %57 : vector<8x16x128xf32>
    %59 = vector.extract_strided_slice %6 {offsets = [2, 0, 0], sizes = [6, 16, 128], strides = [1, 1, 1]} : vector<8x16x128xf32> to vector<6x16x128xf32>
    %60 = tpu.concatenate %59, %29 in 0 : vector<6x16x128xf32>, vector<2x16x128xf32> -> vector<8x16x128xf32>
    %c2_25 = arith.constant 2 : index
    %c0_26 = arith.constant 0 : index
    %c0_27 = arith.constant 0 : index
    %61 = vector.load %arg4[%c2_25, %c0_26, %c0_27] : memref<3x3x128xf32, #tpu.memory_space<vmem>>, vector<1x1x128xf32>
    %62 = vector.shape_cast %61 : vector<1x1x128xf32> to vector<128xf32>
    %63 = vector.shape_cast %62 : vector<128xf32> to vector<1x1x128xf32>
    %64 = vector.broadcast %63 : vector<1x1x128xf32> to vector<8x16x128xf32>
    %65 = arith.mulf %60, %64 : vector<8x16x128xf32>
    %66 = arith.addf %58, %65 : vector<8x16x128xf32>
    %67 = vector.extract_strided_slice %7 {offsets = [2, 0, 0], sizes = [6, 16, 128], strides = [1, 1, 1]} : vector<8x16x128xf32> to vector<6x16x128xf32>
    %68 = tpu.concatenate %67, %30 in 0 : vector<6x16x128xf32>, vector<2x16x128xf32> -> vector<8x16x128xf32>
    %c2_28 = arith.constant 2 : index
    %c1_29 = arith.constant 1 : index
    %c0_30 = arith.constant 0 : index
    %69 = vector.load %arg4[%c2_28, %c1_29, %c0_30] : memref<3x3x128xf32, #tpu.memory_space<vmem>>, vector<1x1x128xf32>
    %70 = vector.shape_cast %69 : vector<1x1x128xf32> to vector<128xf32>
    %71 = vector.shape_cast %70 : vector<128xf32> to vector<1x1x128xf32>
    %72 = vector.broadcast %71 : vector<1x1x128xf32> to vector<8x16x128xf32>
    %73 = arith.mulf %68, %72 : vector<8x16x128xf32>
    %74 = arith.addf %66, %73 : vector<8x16x128xf32>
    %75 = vector.extract_strided_slice %8 {offsets = [2, 0, 0], sizes = [6, 16, 128], strides = [1, 1, 1]} : vector<8x16x128xf32> to vector<6x16x128xf32>
    %76 = tpu.concatenate %75, %31 in 0 : vector<6x16x128xf32>, vector<2x16x128xf32> -> vector<8x16x128xf32>
    %c2_31 = arith.constant 2 : index
    %c2_32 = arith.constant 2 : index
    %c0_33 = arith.constant 0 : index
    %77 = vector.load %arg4[%c2_31, %c2_32, %c0_33] : memref<3x3x128xf32, #tpu.memory_space<vmem>>, vector<1x1x128xf32>
    %78 = vector.shape_cast %77 : vector<1x1x128xf32> to vector<128xf32>
    %79 = vector.shape_cast %78 : vector<128xf32> to vector<1x1x128xf32>
    %80 = vector.broadcast %79 : vector<1x1x128xf32> to vector<8x16x128xf32>
    %81 = arith.mulf %76, %80 : vector<8x16x128xf32>
    %82 = arith.addf %74, %81 : vector<8x16x128xf32>
    %83 = vector.shape_cast %82 : vector<8x16x128xf32> to vector<128x128xf32>
    %84 = arith.truncf %83 : vector<128x128xf32> to vector<128x128xbf16>
    %c0_34 = arith.constant 0 : index
    %c0_35 = arith.constant 0 : index
    %85 = vector.load %arg5[%c0_34, %c0_35] : memref<128x128xbf16, #tpu.memory_space<vmem>>, vector<128x128xbf16>
    %cst = arith.constant dense<0.000000e+00> : vector<128x128xf32>
    %86 = tpu.matmul %84, %85, %cst {dimension_numbers = #tpu.dot_dimension_numbers<[1], [0], [0], [1], [0, 0, 1, 1], [], []>} : vector<128x128xbf16>, vector<128x128xbf16>, vector<128x128xf32> -> vector<128x128xf32>
    %c0_36 = arith.constant 0 : index
    %c0_37 = arith.constant 0 : index
    %87 = vector.load %arg6[%c0_36, %c0_37] : memref<1x128xf32, #tpu.memory_space<vmem>>, vector<1x128xf32>
    %88 = vector.shape_cast %87 : vector<1x128xf32> to vector<128xf32>
    %89 = vector.shape_cast %88 : vector<128xf32> to vector<1x128xf32>
    %90 = vector.broadcast %89 : vector<1x128xf32> to vector<128x128xf32>
    %91 = arith.addf %86, %90 : vector<128x128xf32>
    %cst_38 = arith.constant 0.000000e+00 : f32
    %92 = vector.broadcast %cst_38 : f32 to vector<128x128xf32>
    %93 = arith.maximumf %91, %92 : vector<128x128xf32>
    %94 = vector.shape_cast %93 : vector<128x128xf32> to vector<8x16x128xf32>
    %c0_39 = arith.constant 0 : index
    %c0_40 = arith.constant 0 : index
    %c0_41 = arith.constant 0 : index
    %c0_42 = arith.constant 0 : index
    %95 = vector.load %arg7[%c0_39, %c0_40, %c0_41, %c0_42] : memref<1x8x16x128xf32, #tpu.memory_space<vmem>>, vector<1x8x16x128xf32>
    %96 = vector.shape_cast %95 : vector<1x8x16x128xf32> to vector<8x16x128xf32>
    %97 = vector.shape_cast %94 : vector<8x16x128xf32> to vector<1x8x16x128xf32>
    tpu.vector_store %arg7[%c0_39, %c0_40, %c0_41, %c0_42], %97 {strides = array<i32>} : memref<1x8x16x128xf32, #tpu.memory_space<vmem>>, vector<1x8x16x128xf32>,
    return
  }
  func.func @transform_0(%arg0: i32, %arg1: i32) -> (i32, i32, i32, i32) {
    %c0_i32 = arith.constant 0 : i32
    %c0_i32_0 = arith.constant 0 : i32
    %c0_i32_1 = arith.constant 0 : i32
    return %arg0, %arg1, %c0_i32, %c0_i32_0 : i32, i32, i32, i32
  }
  func.func @transform_2(%arg0: i32, %arg1: i32) -> (i32, i32, i32) {
    %c0_i32 = arith.constant 0 : i32
    %c0_i32_0 = arith.constant 0 : i32
    %c0_i32_1 = arith.constant 0 : i32
    %c0_i32_2 = arith.constant 0 : i32
    return %c0_i32, %c0_i32_0, %c0_i32_1 : i32, i32, i32
  }
  func.func @transform_3(%arg0: i32, %arg1: i32) -> (i32, i32) {
    %c0_i32 = arith.constant 0 : i32
    %c0_i32_0 = arith.constant 0 : i32
    %c0_i32_1 = arith.constant 0 : i32
    return %c0_i32, %c0_i32_0 : i32, i32
  }
  func.func @transform_4(%arg0: i32, %arg1: i32) -> (i32, i32) {
    %c0_i32 = arith.constant 0 : i32
    %c0_i32_0 = arith.constant 0 : i32
    %c0_i32_1 = arith.constant 0 : i32
    return %c0_i32, %c0_i32_0 : i32, i32
  }
  func.func @transform_5(%arg0: i32, %arg1: i32) -> (i32, i32, i32, i32) {
    %c0_i32 = arith.constant 0 : i32
    %c0_i32_0 = arith.constant 0 : i32
    %c0_i32_1 = arith.constant 0 : i32
    return %arg0, %arg1, %c0_i32, %c0_i32_0 : i32, i32, i32, i32
  }
}

</mosaic_0001>

<llo_original>
// kernel: tpu_custom_call.1
$region0: #{tpu_custom_call.1}
  #allocation0 [shape = 'u32[]', space=smem, size = 0x4, offset = 0x4, fixed_abs, tag = 'smem constant byte address 0x4 - core index']
  #allocation1 [shape = 'u32[144,128]{1,0:T(1,128)}', space=vmem, size = 0x12000, scoped, tag = 'internal scratch']
  #allocation2 [shape = 'f32[2,18,128]{2,1,0:T(8,128)}', space=vmem, size = 0x6000, scoped, tag = 'scratch operand']
  #allocation3 [shape = 's32[1]{0}', space=sflag, size = 0x4, scoped, tag = 'scratch operand']
  #allocation6 [shape = 's32[]', space=sflag, size = 0x4, offset = 0, fixed_abs, tag = 'sflag constant byte address 0x0 - dummy sync flag']
  %s0 = inlined_call_operand.vmem [shape: f32[2,18,18,128], index: 0, kind: input, shape index: {}]
  %s1 = inlined_call_operand.vmem [shape: f32[2,18,18,128], index: 1, kind: input, shape index: {}]
  %s2 = inlined_call_operand.vmem [shape: f32[3,3,128], index: 2, kind: input, shape index: {}]
  %s3 = inlined_call_operand.vmem [shape: bf16[128,128], index: 3, kind: input, shape index: {}]
  %s4 = inlined_call_operand.vmem [shape: f32[1,128], index: 4, kind: input, shape index: {}]
  %s5 = inlined_call_operand.hbm [shape: f32[2,16,16,128], index: 5, kind: output, shape index: {}]
  %s6 = sld [smem:[#allocation0]]
  $region86: #{tpu_custom_call.1} parent=0
    _
  %s8 = ssub.s32 1, %s6
  %s9 = scalar_select 0, %s8, %s6
  $region1: #{tpu_custom_call.1} parent=0
    #allocation4 [shape = 'u8[131072]{0}', space=vmem, size = 0x20000, scoped, tag = 'output window, operand 0']
    #allocation5 [shape = 's32[2]{0}', space=sflag, size = 0x8, scoped, tag = 'scoped memory for tpu_custom_call.1']
    %10 = vsyncpa [#allocation5], 0
    %s11 = scalar_lea.sflag [#allocation5], 1
    %12 = vsyncpa %s11, 0
    loop: start=0, step=1, limit=6
    $region2: #{tpu_custom_call.1} parent=1 // loop_pre_header
      _
    $region3: #{tpu_custom_call.1} parent=1 // loop_header
      %s14 = sphi 0, %s18
      %p15 = scmp.ge.s32.totalorder %s14, 6
      %s21 = sphi 0, %s33
      %s22 = sphi 0, %s29
      %s23 = sphi 0, %s21
      %s24 = sphi 0, %s22
      %s25 = sphi 0, %s23
      %s26 = sphi 0, %s24
      %s38 = sphi 0, %s40
      %s41 = sphi 0, %s38
      %s42 = sphi 0, %s41
      %s58 = sphi 0, %s42
      %s62 = sphi 0, %s62
      %s64 = sphi 0, %s62
      %s65 = sphi 0, %s64
      %s79 = sphi 0, %s65
      %s83 = sphi 0, %s83
      %s85 = sphi 0, %s83
      %s86 = sphi 0, %s85
      %s100 = sphi 0, %s86
      %s104 = sphi 0, %s104
      %s106 = sphi 0, %s104
      %s107 = sphi 0, %s106
      %s121 = sphi 0, %s107
      %s129 = sphi 0, %s131
      %s132 = sphi 0, %s129
      %s133 = sphi 0, %s132
      %s149 = sphi 0, %s133
    $region4: #{tpu_custom_call.1} parent=1 // loop_header_branch
      %17 = sbr.rel (%p15) target = $region8
    $region5: #{tpu_custom_call.1} parent=1 // loop_body
      %s19 = ssub.s32 %s14, 1
      %s20 = ssub.s32 %s14, 2
      %s27 = sadd.s32 1, %s22
      %p28 = scmp.ge.s32.totalorder %s27, 2
      %s29 = scalar_select %p28, 0, %s27
      %s30 = sadd.s32 1, %s21
      %s31 = scalar_select %p28, %s30, %s21
      %p32 = scmp.ge.s32.totalorder %s31, 2
      %s33 = scalar_select %p32, 0, %s31
      %s34 = ssub.s32 %s21, %s33
      %s35 = ssub.s32 %s22, %s29
      %s36 = sor.u32 %s34, %s35
      %p37 = scmp.eq.s32.totalorder %s36, 0
      %s39 = sadd.s32 %s38, 1
      %s40 = scalar_select %p37, %s38, %s39
      %p43 = pneg %p37
      %p44 = scmp.eq.s32.totalorder %s14, 3
      %p45 = por %p43, %p44
      %p46 = scmp.ne.s32.totalorder %s38, %s41
      %p47 = scmp.eq.s32.totalorder %s14, 0
      %p48 = por %p46, %p47
      %p49 = scmp.ne.s32.totalorder %s38, %s41
      %p50 = scmp.eq.s32.totalorder %s19, 3
      %p51 = por %p49, %p50
      %p52 = scmp.ne.s32.totalorder %s41, %s42
      %p53 = scmp.eq.s32.totalorder %s19, 0
      %p54 = por %p52, %p53
      %p55 = scmp.ne.s32.totalorder %s41, %s42
      %p56 = scmp.eq.s32.totalorder %s20, 3
      %p57 = por %p55, %p56
      %p59 = scmp.ne.s32.totalorder %s42, %s58
      %p60 = scmp.eq.s32.totalorder %s20, 0
      %p61 = por %p59, %p60
      %s63 = sadd.s32 %s62, 1
      %p66 = scmp.eq.s32.totalorder %s14, 3
      %p67 = scmp.ne.s32.totalorder %s62, %s64
      %p68 = scmp.eq.s32.totalorder %s14, 0
      %p69 = por %p67, %p68
      %p70 = scmp.ne.s32.totalorder %s62, %s64
      %p71 = scmp.eq.s32.totalorder %s19, 3
      %p72 = por %p70, %p71
      %p73 = scmp.ne.s32.totalorder %s64, %s65
      %p74 = scmp.eq.s32.totalorder %s19, 0
      %p75 = por %p73, %p74
      %p76 = scmp.ne.s32.totalorder %s64, %s65
      %p77 = scmp.eq.s32.totalorder %s20, 3
      %p78 = por %p76, %p77
      %p80 = scmp.ne.s32.totalorder %s65, %s79
      %p81 = scmp.eq.s32.totalorder %s20, 0
      %p82 = por %p80, %p81
      %s84 = sadd.s32 %s83, 1
      %p87 = scmp.eq.s32.totalorder %s14, 3
      %p88 = scmp.ne.s32.totalorder %s83, %s85
      %p89 = scmp.eq.s32.totalorder %s14, 0
      %p90 = por %p88, %p89
      %p91 = scmp.ne.s32.totalorder %s83, %s85
      %p92 = scmp.eq.s32.totalorder %s19, 3
      %p93 = por %p91, %p92
      %p94 = scmp.ne.s32.totalorder %s85, %s86
      %p95 = scmp.eq.s32.totalorder %s19, 0
      %p96 = por %p94, %p95
      %p97 = scmp.ne.s32.totalorder %s85, %s86
      %p98 = scmp.eq.s32.totalorder %s20, 3
      %p99 = por %p97, %p98
      %p101 = scmp.ne.s32.totalorder %s86, %s100
      %p102 = scmp.eq.s32.totalorder %s20, 0
      %p103 = por %p101, %p102
      %s105 = sadd.s32 %s104, 1
      %p108 = scmp.eq.s32.totalorder %s14, 3
      %p109 = scmp.ne.s32.totalorder %s104, %s106
      %p110 = scmp.eq.s32.totalorder %s14, 0
      %p111 = por %p109, %p110
      %p112 = scmp.ne.s32.totalorder %s104, %s106
      %p113 = scmp.eq.s32.totalorder %s19, 3
      %p114 = por %p112, %p113
      %p115 = scmp.ne.s32.totalorder %s106, %s107
      %p116 = scmp.eq.s32.totalorder %s19, 0
      %p117 = por %p115, %p116
      %p118 = scmp.ne.s32.totalorder %s106, %s107
      %p119 = scmp.eq.s32.totalorder %s20, 3
      %p120 = por %p118, %p119
      %p122 = scmp.ne.s32.totalorder %s107, %s121
      %p123 = scmp.eq.s32.totalorder %s20, 0
      %p124 = por %p122, %p123
      %s125 = ssub.s32 %s21, %s33
      %s126 = ssub.s32 %s22, %s29
      %s127 = sor.u32 %s125, %s126
      %p128 = scmp.eq.s32.totalorder %s127, 0
      %s130 = sadd.s32 %s129, 1
      %s131 = scalar_select %p128, %s129, %s130
      %p134 = pneg %p128
      %p135 = scmp.eq.s32.totalorder %s14, 3
      %p136 = por %p134, %p135
      %p137 = scmp.ne.s32.totalorder %s129, %s132
      %p138 = scmp.eq.s32.totalorder %s14, 0
      %p139 = por %p137, %p138
      %p140 = scmp.ne.s32.totalorder %s129, %s132
      %p141 = scmp.eq.s32.totalorder %s19, 3
      %p142 = por %p140, %p141
      %p143 = scmp.ne.s32.totalorder %s132, %s133
      %p144 = scmp.eq.s32.totalorder %s19, 0
      %p145 = por %p143, %p144
      %p146 = scmp.ne.s32.totalorder %s132, %s133
      %p147 = scmp.eq.s32.totalorder %s20, 3
      %p148 = por %p146, %p147
      %p150 = scmp.ne.s32.totalorder %s133, %s149
      %p151 = scmp.eq.s32.totalorder %s20, 0
      %p152 = por %p150, %p151
      %p153 = scmp.le.s32.totalorder 1, %s14
      %p154 = scmp.lt.s32.totalorder %s14, 5
      %p155 = pnand %p153, %p154
      %p156 = pneg %p155
      // Predicated region
      $region9: #{tpu_custom_call.1} parent=5 // pred_check
        _
      $region10: #{tpu_custom_call.1} parent=5 // pred_check_branch
        %158 = sbr.rel (%p155) target = $region12
      $region11: #{tpu_custom_call.1} parent=5 // pred_region
        %s159 = ssub.s32 %s14, 1
        // Predicated region
        $region13: #{tpu_custom_call.1} parent=11 // pred_check
          %p160 = pneg %p75
        $region14: #{tpu_custom_call.1} parent=11 // pred_check_branch
          %162 = sbr.rel (%p160) target = $region16
        $region15: #{tpu_custom_call.1} parent=11 // pred_region
          _
        $region16: #{tpu_custom_call.1} parent=11 // pred_fallthru
          _
        // Predicated region
        $region17: #{tpu_custom_call.1} parent=11 // pred_check
          %p163 = pneg %p96
        $region18: #{tpu_custom_call.1} parent=11 // pred_check_branch
          %165 = sbr.rel (%p163) target = $region20
        $region19: #{tpu_custom_call.1} parent=11 // pred_region
          _
        $region20: #{tpu_custom_call.1} parent=11 // pred_fallthru
          _
        // Predicated region
        $region21: #{tpu_custom_call.1} parent=11 // pred_check
          %p166 = pneg %p117
        $region22: #{tpu_custom_call.1} parent=11 // pred_check_branch
          %168 = sbr.rel (%p166) target = $region24
        $region23: #{tpu_custom_call.1} parent=11 // pred_region
          _
        $region24: #{tpu_custom_call.1} parent=11 // pred_fallthru
          _
      $region12: #{tpu_custom_call.1} parent=5 // pred_fallthru
        _
      %p169 = scmp.lt.s32.totalorder %s14, 4
      // Predicated region
      $region25: #{tpu_custom_call.1} parent=5 // pred_check
        %p170 = pneg %p169
      $region26: #{tpu_custom_call.1} parent=5 // pred_check_branch
        %172 = sbr.rel (%p170) target = $region28
      $region27: #{tpu_custom_call.1} parent=5 // pred_region
        // Predicated region
        $region29: #{tpu_custom_call.1} parent=27 // pred_check
          %p173 = pneg %p48
        $region30: #{tpu_custom_call.1} parent=27 // pred_check_branch
          %175 = sbr.rel (%p173) target = $region32
        $region31: #{tpu_custom_call.1} parent=27 // pred_region
          %s176 = smul.u32 8, %s22
          %s177 = ssub.s32 18, %s176
          %p178 = scmp.lt.s32.totalorder %s177, 8
          %s179 = scalar_select %p178, %s177, 8
          %s180 = smul.u32 128, %s179
          %s181 = smul.u32 %s180, 3
          %p182 = scmp.lt.s32.totalorder %s21, 1
          %s183 = scalar_select %p182, %s21, 1
          %p184 = scmp.lt.s32.totalorder %s176, 17
          %s185 = scalar_select %p184, %s176, 17
          %s186 = smul.addr %s185, 3
          %s187 = smul.addr %s183, 54
          %s188 = sadd.s32 %s186, %s187
          %s189 = smul.addr %s188, 8
          %s190 = scalar_lea.vmem %s0, %s189
          %s191 = smul.u32 8, %s22
          %s192 = ssub.s32 18, %s191
          %p193 = scmp.lt.s32.totalorder %s192, 8
          %s194 = scalar_select %p193, %s192, 8
          %s195 = smul.u32 128, %s194
          %s196 = smul.u32 %s195, 3
        $region32: #{tpu_custom_call.1} parent=27 // pred_fallthru
          _
      $region28: #{tpu_custom_call.1} parent=5 // pred_fallthru
        _
      %p197 = scmp.le.s32.totalorder 1, %s14
      %p198 = scmp.lt.s32.totalorder %s14, 5
      %p199 = pnand %p197, %p198
      %p200 = pneg %p199
      // Predicated region
      $region33: #{tpu_custom_call.1} parent=5 // pred_check
        _
      $region34: #{tpu_custom_call.1} parent=5 // pred_check_branch
        %202 = sbr.rel (%p199) target = $region36
      $region35: #{tpu_custom_call.1} parent=5 // pred_region
        %s203 = ssub.s32 %s14, 1
        %s204 = smul.u32 8, %s24
        %s205 = ssub.s32 18, %s204
        %p206 = scmp.lt.s32.totalorder %s205, 8
        %s207 = scalar_select %p206, %s205, 8
        %s208 = smul.u32 128, %s207
        %s209 = smul.u32 %s208, 3
        %p210 = scmp.lt.s32.totalorder %s23, 1
        %s211 = scalar_select %p210, %s23, 1
        %p212 = scmp.lt.s32.totalorder %s204, 17
        %s213 = scalar_select %p212, %s204, 17
        %s214 = smul.addr %s213, 3
        %s215 = smul.addr %s211, 54
        %s216 = sadd.s32 %s214, %s215
        %s217 = smul.addr %s216, 8
        %s218 = scalar_lea.vmem %s0, %s217
        %p219 = pneg %p54
        %p220 = pneg %p51
        %p221 = pneg %p75
        %p222 = pneg %p72
        %p223 = pneg %p96
        %p224 = pneg %p93
        %p225 = pneg %p117
        %p226 = pneg %p114
        %p227 = pneg %p145
        %p228 = pneg %p142
        %s229 = sand.u32 %s132, 1
        %s230 = scalar_lea.sflag [#allocation5], %s229
        %s231 = sand.u32 %s132, 1
        %s232 = smul.addr %s231, 128
        %s233 = scalar_lea.vmem [#allocation4], %s232
        %s234 = smul.u32 8, %s24
        %s235 = ssub.s32 18, %s234
        %p236 = scmp.lt.s32.totalorder %s235, 8
        %s237 = scalar_select %p236, %s235, 8
        %s238 = smul.u32 128, %s237
        %s239 = smul.u32 %s238, 3
        %p240 = scmp.lt.s32.totalorder %s23, 1
        %s241 = scalar_select %p240, %s23, 1
        %p242 = scmp.lt.s32.totalorder %s234, 17
        %s243 = scalar_select %p242, %s234, 17
        %s244 = smul.addr %s243, 3
        %s245 = smul.addr %s241, 54
        %s246 = sadd.s32 %s244, %s245
        %s247 = smul.addr %s246, 8
        %s248 = scalar_lea.vmem %s0, %s247
        %s249 = smul.u32 8, %s24
        %s250 = ssub.s32 18, %s249
        %p251 = scmp.lt.s32.totalorder %s250, 8
        %s252 = scalar_select %p251, %s250, 8
        %s253 = smul.u32 128, %s252
        %s254 = smul.u32 %s253, 3
        %s255 = smul.u32 8, %s24
        %s257 = sadd.s32 %s24, 1
        %s258 = smul.u32 %s257, 8
        %s259 = smul.u32 %s258, 24
        %s260 = smul.u32 %s23, 432
        %s261 = sadd.s32 %s259, %s260
        %s262 = scalar_lea.vmem %s1, %s261
        %p264 = scmp.lt.u32.totalorder 18, 8
        %p265 = pneg %p264
        // Predicated region
        $region37: #{tpu_custom_call.1} parent=35 // pred_check
          _
        $region38: #{tpu_custom_call.1} parent=35 // pred_check_branch
          %267 = sbr.rel (%p264) target = $region40
        $region39: #{tpu_custom_call.1} parent=35 // pred_region
          %s284 = sand.u32 18, 7
          %p285 = scmp.eq.s32.totalorder %s284, 0
          %p286 = pneg %p285
          // Predicated region
          $region52: #{tpu_custom_call.1} parent=39 // pred_check
            _
          $region53: #{tpu_custom_call.1} parent=39 // pred_check_branch
            %288 = sbr.rel (%p285) target = $region55
          $region54: #{tpu_custom_call.1} parent=39 // pred_region
            %s289 = sand.u32 18, 7
            %s290 = ssub.s32 18, %s289
            %s291 = scalar_lea.vmem %s262, %s290
            %s292 = ssub.s32 18, %s289
            %s293 = scalar_lea.vmem [#allocation2], %s292
            loop: start=0, step=1, limit=1
            $region56: #{tpu_custom_call.1} parent=54 // loop_pre_header
              _
            $region57: #{tpu_custom_call.1} parent=54 // loop_header
              %s295 = sphi 0, %s299
              %p296 = scmp.ge.s32.totalorder %s295, 1
              %s300 = sphi %s262, %s262
              %s301 = sphi [#allocation2], [#allocation2]
            $region58: #{tpu_custom_call.1} parent=54 // loop_header_branch
              %298 = sbr.rel (%p296) target = $region62
            $region59: #{tpu_custom_call.1} parent=54 // loop_body
              %v302 = vld [vmem:[%s300] sm:$0xff]
              %303 = vst [vmem:[%s301] sm:$0xff] %v302
              %v304 = vld [vmem:[%s300 + $0x8] sm:$0xff]
              %305 = vst [vmem:[%s301 + $0x8] sm:$0xff] %v304
              %v306 = vld [vmem:[%s300 + $0x18] sm:$0xff]
              %307 = vst [vmem:[%s301 + $0x18] sm:$0xff] %v306
              %v308 = vld [vmem:[%s300 + $0x20] sm:$0xff]
              %309 = vst [vmem:[%s301 + $0x20] sm:$0xff] %v308
            $region60: #{tpu_custom_call.1} parent=54 // loop_footer
              %s299 = sadd.s32 1, %s295
            $region61: #{tpu_custom_call.1} parent=54 // loop_footer_branch
              %294 = sbr.rel target = $region57
            $region62: #{tpu_custom_call.1} parent=54 // loop_exit
              _
            %s310 = sshllo.u32 0, %s289
            loop: start=0, step=1, limit=1
            $region63: #{tpu_custom_call.1} parent=54 // loop_pre_header
              _
            $region64: #{tpu_custom_call.1} parent=54 // loop_header
              %s312 = sphi 0, %s316
              %p313 = scmp.ge.s32.totalorder %s312, 1
              %s317 = sphi %s291, %s291
              %s318 = sphi %s293, %s293
            $region65: #{tpu_custom_call.1} parent=54 // loop_header_branch
              %315 = sbr.rel (%p313) target = $region69
            $region66: #{tpu_custom_call.1} parent=54 // loop_body
              %v319 = vld [vmem:[%s317] sm:%s310]
              %320 = vst [vmem:[%s318] sm:%s310] %v319
              %v321 = vld [vmem:[%s317 + $0x18] sm:%s310]
              %322 = vst [vmem:[%s318 + $0x18] sm:%s310] %v321
            $region67: #{tpu_custom_call.1} parent=54 // loop_footer
              %s316 = sadd.s32 1, %s312
            $region68: #{tpu_custom_call.1} parent=54 // loop_footer_branch
              %311 = sbr.rel target = $region64
            $region69: #{tpu_custom_call.1} parent=54 // loop_exit
              _
          $region55: #{tpu_custom_call.1} parent=39 // pred_fallthru
            _
        $region40: #{tpu_custom_call.1} parent=35 // pred_fallthru
          _
        // Predicated region
        $region41: #{tpu_custom_call.1} parent=35 // pred_check
          %p268 = pneg %p264
        $region42: #{tpu_custom_call.1} parent=35 // pred_check_branch
          %270 = sbr.rel (%p268) target = $region44
        $region43: #{tpu_custom_call.1} parent=35 // pred_region
          %s271 = sshllo.u32 0, 18
          loop: start=0, step=1, limit=1
          $region45: #{tpu_custom_call.1} parent=43 // loop_pre_header
            _
          $region46: #{tpu_custom_call.1} parent=43 // loop_header
            %s273 = sphi 0, %s277
            %p274 = scmp.ge.s32.totalorder %s273, 1
            %s278 = sphi %s262, %s262
            %s279 = sphi [#allocation2], [#allocation2]
          $region47: #{tpu_custom_call.1} parent=43 // loop_header_branch
            %276 = sbr.rel (%p274) target = $region51
          $region48: #{tpu_custom_call.1} parent=43 // loop_body
            %v280 = vld [vmem:[%s278] sm:%s271]
            %281 = vst [vmem:[%s279] sm:%s271] %v280
            %v282 = vld [vmem:[%s278 + $0x18] sm:%s271]
            %283 = vst [vmem:[%s279 + $0x18] sm:%s271] %v282
          $region49: #{tpu_custom_call.1} parent=43 // loop_footer
            %s277 = sadd.s32 1, %s273
          $region50: #{tpu_custom_call.1} parent=43 // loop_footer_branch
            %272 = sbr.rel target = $region46
          $region51: #{tpu_custom_call.1} parent=43 // loop_exit
            _
        $region44: #{tpu_custom_call.1} parent=35 // pred_fallthru
          _
        // Predicated region
        $region70: #{tpu_custom_call.1} parent=35 // pred_check
          _
        $region71: #{tpu_custom_call.1} parent=35 // pred_check_branch
          %325 = sbr.rel (0) target = $region73
        $region72: #{tpu_custom_call.1} parent=35 // pred_region
          %326 = vsyncadd [#allocation3], 576
        $region73: #{tpu_custom_call.1} parent=35 // pred_fallthru
          _
        %v327 = vld [vmem:[%s248] sm:$0xff]
        %v328 = vld [vmem:[%s248 + $0x8] sm:$0xff]
        %v329 = vld [vmem:[%s248 + $0x10] sm:$0x3]
        %v330 = vld [vmem:[%s248 + $0x18] sm:$0xff]
        %v331 = vld [vmem:[%s248 + $0x20] sm:$0xff]
        %v332 = vld [vmem:[%s248 + $0x28] sm:$0x3]
        %v333 = vld [vmem:[%s248 + $0x30] sm:$0xff]
        %v334 = vld [vmem:[%s248 + $0x38] sm:$0xff]
        %v335 = vld [vmem:[%s248 + $0x40] sm:$0x3]
        %v336 = vld [vmem:[%s248 + $0x48] sm:$0xff]
        %v337 = vld [vmem:[%s248 + $0x50] sm:$0xff]
        %v338 = vld [vmem:[%s248 + $0x58] sm:$0x3]
        %v339 = vld [vmem:[%s248 + $0x60] sm:$0xff]
        %v340 = vld [vmem:[%s248 + $0x68] sm:$0xff]
        %v341 = vld [vmem:[%s248 + $0x70] sm:$0x3]
        %v342 = vld [vmem:[%s248 + $0x78] sm:$0xff]
        %v343 = vld [vmem:[%s248 + $0x80] sm:$0xff]
        %v344 = vld [vmem:[%s248 + $0x88] sm:$0x3]
        %v345 = vld [vmem:[%s248 + $0x90] sm:$0xff]
        %v346 = vld [vmem:[%s248 + $0x98] sm:$0xff]
        %v347 = vld [vmem:[%s248 + $0xa0] sm:$0x3]
        %v348 = vld [vmem:[%s248 + $0xa8] sm:$0xff]
        %v349 = vld [vmem:[%s248 + $0xb0] sm:$0xff]
        %v350 = vld [vmem:[%s248 + $0xb8] sm:$0x3]
        %v351 = vld [vmem:[%s2] sm:$0x1]
        %v352 = vlaneseq
        %v353 = vshrl.u32 %v352, 7
        %v354 = vsub.s32 0, %v353
        %v355 = vrot.slane %v351, %v354
        %v356 = vmul.f32 %v327, %v355
        %v357 = vmul.f32 %v328, %v355
        %v358 = vmul.f32 %v330, %v355
        %v359 = vmul.f32 %v331, %v355
        %v360 = vmul.f32 %v333, %v355
        %v361 = vmul.f32 %v334, %v355
        %v362 = vmul.f32 %v336, %v355
        %v363 = vmul.f32 %v337, %v355
        %v364 = vmul.f32 %v339, %v355
        %v365 = vmul.f32 %v340, %v355
        %v366 = vmul.f32 %v342, %v355
        %v367 = vmul.f32 %v343, %v355
        %v368 = vmul.f32 %v345, %v355
        %v369 = vmul.f32 %v346, %v355
        %v370 = vmul.f32 %v348, %v355
        %v371 = vmul.f32 %v349, %v355
        %v372 = vld [vmem:[%s2 + $0x1] sm:$0x1]
        %v373 = vlaneseq
        %v374 = vshrl.u32 %v373, 7
        %v375 = vsub.s32 0, %v374
        %v376 = vrot.slane %v372, %v375
        %v377 = vmul.f32 %v327, %v376
        %v378 = vmul.f32 %v328, %v376
        %v379 = vmul.f32 %v329, %v376
        %v380 = vmul.f32 %v330, %v376
        %v381 = vmul.f32 %v331, %v376
        %v382 = vmul.f32 %v332, %v376
        %v383 = vmul.f32 %v333, %v376
        %v384 = vmul.f32 %v334, %v376
        %v385 = vmul.f32 %v335, %v376
        %v386 = vmul.f32 %v336, %v376
        %v387 = vmul.f32 %v337, %v376
        %v388 = vmul.f32 %v338, %v376
        %v389 = vmul.f32 %v339, %v376
        %v390 = vmul.f32 %v340, %v376
        %v391 = vmul.f32 %v341, %v376
        %v392 = vmul.f32 %v342, %v376
        %v393 = vmul.f32 %v343, %v376
        %v394 = vmul.f32 %v344, %v376
        %v395 = vmul.f32 %v345, %v376
        %v396 = vmul.f32 %v346, %v376
        %v397 = vmul.f32 %v347, %v376
        %v398 = vmul.f32 %v348, %v376
        %v399 = vmul.f32 %v349, %v376
        %v400 = vmul.f32 %v350, %v376
        %vm425 = vcmask 1046528
        %v426 = vrot.slane %v377, 1
        %v427 = vrot.slane %v378, 1
        %v428 = vsel %vm425, %v426, %v427
        %v429 = vrot.slane %v379, 1
        %v430 = vsel %vm425, %v427, %v429
        %v431 = vrot.slane %v380, 1
        %v432 = vrot.slane %v381, 1
        %v433 = vsel %vm425, %v431, %v432
        %v434 = vrot.slane %v382, 1
        %v435 = vsel %vm425, %v432, %v434
        %v436 = vrot.slane %v383, 1
        %v437 = vrot.slane %v384, 1
        %v438 = vsel %vm425, %v436, %v437
        %v439 = vrot.slane %v385, 1
        %v440 = vsel %vm425, %v437, %v439
        %v441 = vrot.slane %v386, 1
        %v442 = vrot.slane %v387, 1
        %v443 = vsel %vm425, %v441, %v442
        %v444 = vrot.slane %v388, 1
        %v445 = vsel %vm425, %v442, %v444
        %v446 = vrot.slane %v389, 1
        %v447 = vrot.slane %v390, 1
        %v448 = vsel %vm425, %v446, %v447
        %v449 = vrot.slane %v391, 1
        %v450 = vsel %vm425, %v447, %v449
        %v451 = vrot.slane %v392, 1
        %v452 = vrot.slane %v393, 1
        %v453 = vsel %vm425, %v451, %v452
        %v454 = vrot.slane %v394, 1
        %v455 = vsel %vm425, %v452, %v454
        %v456 = vrot.slane %v395, 1
        %v457 = vrot.slane %v396, 1
        %v458 = vsel %vm425, %v456, %v457
        %v459 = vrot.slane %v397, 1
        %v460 = vsel %vm425, %v457, %v459
        %v461 = vrot.slane %v398, 1
        %v462 = vrot.slane %v399, 1
        %v463 = vsel %vm425, %v461, %v462
        %v464 = vrot.slane %v400, 1
        %v465 = vsel %vm425, %v462, %v464
        %v482 = vadd.f32 %v356, %v428
        %v483 = vadd.f32 %v357, %v430
        %v484 = vadd.f32 %v358, %v433
        %v485 = vadd.f32 %v359, %v435
        %v486 = vadd.f32 %v360, %v438
        %v487 = vadd.f32 %v361, %v440
        %v488 = vadd.f32 %v362, %v443
        %v489 = vadd.f32 %v363, %v445
        %v490 = vadd.f32 %v364, %v448
        %v491 = vadd.f32 %v365, %v450
        %v492 = vadd.f32 %v366, %v453
        %v493 = vadd.f32 %v367, %v455
        %v494 = vadd.f32 %v368, %v458
        %v495 = vadd.f32 %v369, %v460
        %v496 = vadd.f32 %v370, %v463
        %v497 = vadd.f32 %v371, %v465
        %v498 = vld [vmem:[%s2 + $0x2] sm:$0x1]
        %v499 = vlaneseq
        %v500 = vshrl.u32 %v499, 7
        %v501 = vsub.s32 0, %v500
        %v502 = vrot.slane %v498, %v501
        %v503 = vmul.f32 %v327, %v502
        %v504 = vmul.f32 %v328, %v502
        %v505 = vmul.f32 %v329, %v502
        %v506 = vmul.f32 %v330, %v502
        %v507 = vmul.f32 %v331, %v502
        %v508 = vmul.f32 %v332, %v502
        %v509 = vmul.f32 %v333, %v502
        %v510 = vmul.f32 %v334, %v502
        %v511 = vmul.f32 %v335, %v502
        %v512 = vmul.f32 %v336, %v502
        %v513 = vmul.f32 %v337, %v502
        %v514 = vmul.f32 %v338, %v502
        %v515 = vmul.f32 %v339, %v502
        %v516 = vmul.f32 %v340, %v502
        %v517 = vmul.f32 %v341, %v502
        %v518 = vmul.f32 %v342, %v502
        %v519 = vmul.f32 %v343, %v502
        %v520 = vmul.f32 %v344, %v502
        %v521 = vmul.f32 %v345, %v502
        %v522 = vmul.f32 %v346, %v502
        %v523 = vmul.f32 %v347, %v502
        %v524 = vmul.f32 %v348, %v502
        %v525 = vmul.f32 %v349, %v502
        %v526 = vmul.f32 %v350, %v502
        %vm551 = vcmask 1045504
        %v552 = vrot.slane %v503, 2
        %v553 = vrot.slane %v504, 2
        %v554 = vsel %vm551, %v552, %v553
        %v555 = vrot.slane %v505, 2
        %v556 = vsel %vm551, %v553, %v555
        %v557 = vrot.slane %v506, 2
        %v558 = vrot.slane %v507, 2
        %v559 = vsel %vm551, %v557, %v558
        %v560 = vrot.slane %v508, 2
        %v561 = vsel %vm551, %v558, %v560
        %v562 = vrot.slane %v509, 2
        %v563 = vrot.slane %v510, 2
        %v564 = vsel %vm551, %v562, %v563
        %v565 = vrot.slane %v511, 2
        %v566 = vsel %vm551, %v563, %v565
        %v567 = vrot.slane %v512, 2
        %v568 = vrot.slane %v513, 2
        %v569 = vsel %vm551, %v567, %v568
        %v570 = vrot.slane %v514, 2
        %v571 = vsel %vm551, %v568, %v570
        %v572 = vrot.slane %v515, 2
        %v573 = vrot.slane %v516, 2
        %v574 = vsel %vm551, %v572, %v573
        %v575 = vrot.slane %v517, 2
        %v576 = vsel %vm551, %v573, %v575
        %v577 = vrot.slane %v518, 2
        %v578 = vrot.slane %v519, 2
        %v579 = vsel %vm551, %v577, %v578
        %v580 = vrot.slane %v520, 2
        %v581 = vsel %vm551, %v578, %v580
        %v582 = vrot.slane %v521, 2
        %v583 = vrot.slane %v522, 2
        %v584 = vsel %vm551, %v582, %v583
        %v585 = vrot.slane %v523, 2
        %v586 = vsel %vm551, %v583, %v585
        %v587 = vrot.slane %v524, 2
        %v588 = vrot.slane %v525, 2
        %v589 = vsel %vm551, %v587, %v588
        %v590 = vrot.slane %v526, 2
        %v591 = vsel %vm551, %v588, %v590
        %v608 = vadd.f32 %v482, %v554
        %v609 = vadd.f32 %v483, %v556
        %v610 = vadd.f32 %v484, %v559
        %v611 = vadd.f32 %v485, %v561
        %v612 = vadd.f32 %v486, %v564
        %v613 = vadd.f32 %v487, %v566
        %v614 = vadd.f32 %v488, %v569
        %v615 = vadd.f32 %v489, %v571
        %v616 = vadd.f32 %v490, %v574
        %v617 = vadd.f32 %v491, %v576
        %v618 = vadd.f32 %v492, %v579
        %v619 = vadd.f32 %v493, %v581
        %v620 = vadd.f32 %v494, %v584
        %v621 = vadd.f32 %v495, %v586
        %v622 = vadd.f32 %v496, %v589
        %v623 = vadd.f32 %v497, %v591
        %s624 = smul.u32 2, 18
        %s625 = smul.u32 %s624, 1
        %s626 = sshll.u32 %s625, 4
        %627 = dma.done [#allocation3], %s626
        %v628 = vld [vmem:[#allocation2] sm:$0xff]
        %v629 = vld [vmem:[#allocation2 + $0x8] sm:$0xff]
        %v630 = vld [vmem:[#allocation2 + $0x10] sm:$0x3]
        %v631 = vld [vmem:[#allocation2 + $0x18] sm:$0xff]
        %v632 = vld [vmem:[#allocation2 + $0x20] sm:$0xff]
        %v633 = vld [vmem:[#allocation2 + $0x28] sm:$0x3]
        %s634 = scalar_lea.vmem %s2, 4
        %v635 = vld [vmem:[%s634] sm:$0x1]
        %v636 = vlaneseq
        %v637 = vshrl.u32 %v636, 7
        %v638 = vsub.s32 0, %v637
        %v639 = vrot.slane %v635, %v638
        %v640 = vmul.f32 %v330, %v639
        %v641 = vmul.f32 %v331, %v639
        %v642 = vmul.f32 %v333, %v639
        %v643 = vmul.f32 %v334, %v639
        %v644 = vmul.f32 %v336, %v639
        %v645 = vmul.f32 %v337, %v639
        %v646 = vmul.f32 %v339, %v639
        %v647 = vmul.f32 %v340, %v639
        %v648 = vmul.f32 %v342, %v639
        %v649 = vmul.f32 %v343, %v639
        %v650 = vmul.f32 %v345, %v639
        %v651 = vmul.f32 %v346, %v639
        %v652 = vmul.f32 %v348, %v639
        %v653 = vmul.f32 %v349, %v639
        %v654 = vmul.f32 %v628, %v639
        %v655 = vmul.f32 %v629, %v639
        %v656 = vadd.f32 %v608, %v640
        %v657 = vadd.f32 %v609, %v641
        %v658 = vadd.f32 %v610, %v642
        %v659 = vadd.f32 %v611, %v643
        %v660 = vadd.f32 %v612, %v644
        %v661 = vadd.f32 %v613, %v645
        %v662 = vadd.f32 %v614, %v646
        %v663 = vadd.f32 %v615, %v647
        %v664 = vadd.f32 %v616, %v648
        %v665 = vadd.f32 %v617, %v649
        %v666 = vadd.f32 %v618, %v650
        %v667 = vadd.f32 %v619, %v651
        %v668 = vadd.f32 %v620, %v652
        %v669 = vadd.f32 %v621, %v653
        %v670 = vadd.f32 %v622, %v654
        %v671 = vadd.f32 %v623, %v655
        %v672 = vld [vmem:[%s634 + $0x1] sm:$0x1]
        %v673 = vlaneseq
        %v674 = vshrl.u32 %v673, 7
        %v675 = vsub.s32 0, %v674
        %v676 = vrot.slane %v672, %v675
        %v677 = vmul.f32 %v330, %v676
        %v678 = vmul.f32 %v331, %v676
        %v679 = vmul.f32 %v332, %v676
        %v680 = vmul.f32 %v333, %v676
        %v681 = vmul.f32 %v334, %v676
        %v682 = vmul.f32 %v335, %v676
        %v683 = vmul.f32 %v336, %v676
        %v684 = vmul.f32 %v337, %v676
        %v685 = vmul.f32 %v338, %v676
        %v686 = vmul.f32 %v339, %v676
        %v687 = vmul.f32 %v340, %v676
        %v688 = vmul.f32 %v341, %v676
        %v689 = vmul.f32 %v342, %v676
        %v690 = vmul.f32 %v343, %v676
        %v691 = vmul.f32 %v344, %v676
        %v692 = vmul.f32 %v345, %v676
        %v693 = vmul.f32 %v346, %v676
        %v694 = vmul.f32 %v347, %v676
        %v695 = vmul.f32 %v348, %v676
        %v696 = vmul.f32 %v349, %v676
        %v697 = vmul.f32 %v350, %v676
        %v698 = vmul.f32 %v628, %v676
        %v699 = vmul.f32 %v629, %v676
        %v700 = vmul.f32 %v630, %v676
        %v725 = vrot.slane %v677, 1
        %v726 = vrot.slane %v678, 1
        %v727 = vsel %vm425, %v725, %v726
        %v728 = vrot.slane %v679, 1
        %v729 = vsel %vm425, %v726, %v728
        %v730 = vrot.slane %v680, 1
        %v731 = vrot.slane %v681, 1
        %v732 = vsel %vm425, %v730, %v731
        %v733 = vrot.slane %v682, 1
        %v734 = vsel %vm425, %v731, %v733
        %v735 = vrot.slane %v683, 1
        %v736 = vrot.slane %v684, 1
        %v737 = vsel %vm425, %v735, %v736
        %v738 = vrot.slane %v685, 1
        %v739 = vsel %vm425, %v736, %v738
        %v740 = vrot.slane %v686, 1
        %v741 = vrot.slane %v687, 1
        %v742 = vsel %vm425, %v740, %v741
        %v743 = vrot.slane %v688, 1
        %v744 = vsel %vm425, %v741, %v743
        %v745 = vrot.slane %v689, 1
        %v746 = vrot.slane %v690, 1
        %v747 = vsel %vm425, %v745, %v746
        %v748 = vrot.slane %v691, 1
        %v749 = vsel %vm425, %v746, %v748
        %v750 = vrot.slane %v692, 1
        %v751 = vrot.slane %v693, 1
        %v752 = vsel %vm425, %v750, %v751
        %v753 = vrot.slane %v694, 1
        %v754 = vsel %vm425, %v751, %v753
        %v755 = vrot.slane %v695, 1
        %v756 = vrot.slane %v696, 1
        %v757 = vsel %vm425, %v755, %v756
        %v758 = vrot.slane %v697, 1
        %v759 = vsel %vm425, %v756, %v758
        %v760 = vrot.slane %v698, 1
        %v761 = vrot.slane %v699, 1
        %v762 = vsel %vm425, %v760, %v761
        %v763 = vrot.slane %v700, 1
        %v764 = vsel %vm425, %v761, %v763
        %v781 = vadd.f32 %v656, %v727
        %v782 = vadd.f32 %v657, %v729
        %v783 = vadd.f32 %v658, %v732
        %v784 = vadd.f32 %v659, %v734
        %v785 = vadd.f32 %v660, %v737
        %v786 = vadd.f32 %v661, %v739
        %v787 = vadd.f32 %v662, %v742
        %v788 = vadd.f32 %v663, %v744
        %v789 = vadd.f32 %v664, %v747
        %v790 = vadd.f32 %v665, %v749
        %v791 = vadd.f32 %v666, %v752
        %v792 = vadd.f32 %v667, %v754
        %v793 = vadd.f32 %v668, %v757
        %v794 = vadd.f32 %v669, %v759
        %v795 = vadd.f32 %v670, %v762
        %v796 = vadd.f32 %v671, %v764
        %v797 = vld [vmem:[%s634 + $0x2] sm:$0x1]
        %v798 = vlaneseq
        %v799 = vshrl.u32 %v798, 7
        %v800 = vsub.s32 0, %v799
        %v801 = vrot.slane %v797, %v800
        %v802 = vmul.f32 %v330, %v801
        %v803 = vmul.f32 %v331, %v801
        %v804 = vmul.f32 %v332, %v801
        %v805 = vmul.f32 %v333, %v801
        %v806 = vmul.f32 %v334, %v801
        %v807 = vmul.f32 %v335, %v801
        %v808 = vmul.f32 %v336, %v801
        %v809 = vmul.f32 %v337, %v801
        %v810 = vmul.f32 %v338, %v801
        %v811 = vmul.f32 %v339, %v801
        %v812 = vmul.f32 %v340, %v801
        %v813 = vmul.f32 %v341, %v801
        %v814 = vmul.f32 %v342, %v801
        %v815 = vmul.f32 %v343, %v801
        %v816 = vmul.f32 %v344, %v801
        %v817 = vmul.f32 %v345, %v801
        %v818 = vmul.f32 %v346, %v801
        %v819 = vmul.f32 %v347, %v801
        %v820 = vmul.f32 %v348, %v801
        %v821 = vmul.f32 %v349, %v801
        %v822 = vmul.f32 %v350, %v801
        %v823 = vmul.f32 %v628, %v801
        %v824 = vmul.f32 %v629, %v801
        %v825 = vmul.f32 %v630, %v801
        %v850 = vrot.slane %v802, 2
        %v851 = vrot.slane %v803, 2
        %v852 = vsel %vm551, %v850, %v851
        %v853 = vrot.slane %v804, 2
        %v854 = vsel %vm551, %v851, %v853
        %v855 = vrot.slane %v805, 2
        %v856 = vrot.slane %v806, 2
        %v857 = vsel %vm551, %v855, %v856
        %v858 = vrot.slane %v807, 2
        %v859 = vsel %vm551, %v856, %v858
        %v860 = vrot.slane %v808, 2
        %v861 = vrot.slane %v809, 2
        %v862 = vsel %vm551, %v860, %v861
        %v863 = vrot.slane %v810, 2
        %v864 = vsel %vm551, %v861, %v863
        %v865 = vrot.slane %v811, 2
        %v866 = vrot.slane %v812, 2
        %v867 = vsel %vm551, %v865, %v866
        %v868 = vrot.slane %v813, 2
        %v869 = vsel %vm551, %v866, %v868
        %v870 = vrot.slane %v814, 2
        %v871 = vrot.slane %v815, 2
        %v872 = vsel %vm551, %v870, %v871
        %v873 = vrot.slane %v816, 2
        %v874 = vsel %vm551, %v871, %v873
        %v875 = vrot.slane %v817, 2
        %v876 = vrot.slane %v818, 2
        %v877 = vsel %vm551, %v875, %v876
        %v878 = vrot.slane %v819, 2
        %v879 = vsel %vm551, %v876, %v878
        %v880 = vrot.slane %v820, 2
        %v881 = vrot.slane %v821, 2
        %v882 = vsel %vm551, %v880, %v881
        %v883 = vrot.slane %v822, 2
        %v884 = vsel %vm551, %v881, %v883
        %v885 = vrot.slane %v823, 2
        %v886 = vrot.slane %v824, 2
        %v887 = vsel %vm551, %v885, %v886
        %v888 = vrot.slane %v825, 2
        %v889 = vsel %vm551, %v886, %v888
        %v906 = vadd.f32 %v781, %v852
        %v907 = vadd.f32 %v782, %v854
        %v908 = vadd.f32 %v783, %v857
        %v909 = vadd.f32 %v784, %v859
        %v910 = vadd.f32 %v785, %v862
        %v911 = vadd.f32 %v786, %v864
        %v912 = vadd.f32 %v787, %v867
        %v913 = vadd.f32 %v788, %v869
        %v914 = vadd.f32 %v789, %v872
        %v915 = vadd.f32 %v790, %v874
        %v916 = vadd.f32 %v791, %v877
        %v917 = vadd.f32 %v792, %v879
        %v918 = vadd.f32 %v793, %v882
        %v919 = vadd.f32 %v794, %v884
        %v920 = vadd.f32 %v795, %v887
        %v921 = vadd.f32 %v796, %v889
        %s922 = scalar_lea.vmem %s2, 8
        %v923 = vld [vmem:[%s922] sm:$0x1]
        %v924 = vlaneseq
        %v925 = vshrl.u32 %v924, 7
        %v926 = vsub.s32 0, %v925
        %v927 = vrot.slane %v923, %v926
        %v928 = vmul.f32 %v333, %v927
        %v929 = vmul.f32 %v334, %v927
        %v930 = vmul.f32 %v336, %v927
        %v931 = vmul.f32 %v337, %v927
        %v932 = vmul.f32 %v339, %v927
        %v933 = vmul.f32 %v340, %v927
        %v934 = vmul.f32 %v342, %v927
        %v935 = vmul.f32 %v343, %v927
        %v936 = vmul.f32 %v345, %v927
        %v937 = vmul.f32 %v346, %v927
        %v938 = vmul.f32 %v348, %v927
        %v939 = vmul.f32 %v349, %v927
        %v940 = vmul.f32 %v628, %v927
        %v941 = vmul.f32 %v629, %v927
        %v942 = vmul.f32 %v631, %v927
        %v943 = vmul.f32 %v632, %v927
        %v944 = vadd.f32 %v906, %v928
        %v945 = vadd.f32 %v907, %v929
        %v946 = vadd.f32 %v908, %v930
        %v947 = vadd.f32 %v909, %v931
        %v948 = vadd.f32 %v910, %v932
        %v949 = vadd.f32 %v911, %v933
        %v950 = vadd.f32 %v912, %v934
        %v951 = vadd.f32 %v913, %v935
        %v952 = vadd.f32 %v914, %v936
        %v953 = vadd.f32 %v915, %v937
        %v954 = vadd.f32 %v916, %v938
        %v955 = vadd.f32 %v917, %v939
        %v956 = vadd.f32 %v918, %v940
        %v957 = vadd.f32 %v919, %v941
        %v958 = vadd.f32 %v920, %v942
        %v959 = vadd.f32 %v921, %v943
        %v960 = vld [vmem:[%s922 + $0x1] sm:$0x1]
        %v961 = vlaneseq
        %v962 = vshrl.u32 %v961, 7
        %v963 = vsub.s32 0, %v962
        %v964 = vrot.slane %v960, %v963
        %v965 = vmul.f32 %v333, %v964
        %v966 = vmul.f32 %v334, %v964
        %v967 = vmul.f32 %v335, %v964
        %v968 = vmul.f32 %v336, %v964
        %v969 = vmul.f32 %v337, %v964
        %v970 = vmul.f32 %v338, %v964
        %v971 = vmul.f32 %v339, %v964
        %v972 = vmul.f32 %v340, %v964
        %v973 = vmul.f32 %v341, %v964
        %v974 = vmul.f32 %v342, %v964
        %v975 = vmul.f32 %v343, %v964
        %v976 = vmul.f32 %v344, %v964
        %v977 = vmul.f32 %v345, %v964
        %v978 = vmul.f32 %v346, %v964
        %v979 = vmul.f32 %v347, %v964
        %v980 = vmul.f32 %v348, %v964
        %v981 = vmul.f32 %v349, %v964
        %v982 = vmul.f32 %v350, %v964
        %v983 = vmul.f32 %v628, %v964
        %v984 = vmul.f32 %v629, %v964
        %v985 = vmul.f32 %v630, %v964
        %v986 = vmul.f32 %v631, %v964
        %v987 = vmul.f32 %v632, %v964
        %v988 = vmul.f32 %v633, %v964
        %v1013 = vrot.slane %v965, 1
        %v1014 = vrot.slane %v966, 1
        %v1015 = vsel %vm425, %v1013, %v1014
        %v1016 = vrot.slane %v967, 1
        %v1017 = vsel %vm425, %v1014, %v1016
        %v1018 = vrot.slane %v968, 1
        %v1019 = vrot.slane %v969, 1
        %v1020 = vsel %vm425, %v1018, %v1019
        %v1021 = vrot.slane %v970, 1
        %v1022 = vsel %vm425, %v1019, %v1021
        %v1023 = vrot.slane %v971, 1
        %v1024 = vrot.slane %v972, 1
        %v1025 = vsel %vm425, %v1023, %v1024
        %v1026 = vrot.slane %v973, 1
        %v1027 = vsel %vm425, %v1024, %v1026
        %v1028 = vrot.slane %v974, 1
        %v1029 = vrot.slane %v975, 1
        %v1030 = vsel %vm425, %v1028, %v1029
        %v1031 = vrot.slane %v976, 1
        %v1032 = vsel %vm425, %v1029, %v1031
        %v1033 = vrot.slane %v977, 1
        %v1034 = vrot.slane %v978, 1
        %v1035 = vsel %vm425, %v1033, %v1034
        %v1036 = vrot.slane %v979, 1
        %v1037 = vsel %vm425, %v1034, %v1036
        %v1038 = vrot.slane %v980, 1
        %v1039 = vrot.slane %v981, 1
        %v1040 = vsel %vm425, %v1038, %v1039
        %v1041 = vrot.slane %v982, 1
        %v1042 = vsel %vm425, %v1039, %v1041
        %v1043 = vrot.slane %v983, 1
        %v1044 = vrot.slane %v984, 1
        %v1045 = vsel %vm425, %v1043, %v1044
        %v1046 = vrot.slane %v985, 1
        %v1047 = vsel %vm425, %v1044, %v1046
        %v1048 = vrot.slane %v986, 1
        %v1049 = vrot.slane %v987, 1
        %v1050 = vsel %vm425, %v1048, %v1049
        %v1051 = vrot.slane %v988, 1
        %v1052 = vsel %vm425, %v1049, %v1051
        %v1069 = vadd.f32 %v944, %v1015
        %v1070 = vadd.f32 %v945, %v1017
        %v1071 = vadd.f32 %v946, %v1020
        %v1072 = vadd.f32 %v947, %v1022
        %v1073 = vadd.f32 %v948, %v1025
        %v1074 = vadd.f32 %v949, %v1027
        %v1075 = vadd.f32 %v950, %v1030
        %v1076 = vadd.f32 %v951, %v1032
        %v1077 = vadd.f32 %v952, %v1035
        %v1078 = vadd.f32 %v953, %v1037
        %v1079 = vadd.f32 %v954, %v1040
        %v1080 = vadd.f32 %v955, %v1042
        %v1081 = vadd.f32 %v956, %v1045
        %v1082 = vadd.f32 %v957, %v1047
        %v1083 = vadd.f32 %v958, %v1050
        %v1084 = vadd.f32 %v959, %v1052
        %v1085 = vld [vmem:[%s922 + $0x2] sm:$0x1]
        %v1086 = vlaneseq
        %v1087 = vshrl.u32 %v1086, 7
        %v1088 = vsub.s32 0, %v1087
        %v1089 = vrot.slane %v1085, %v1088
        %v1090 = vmul.f32 %v333, %v1089
        %v1091 = vmul.f32 %v334, %v1089
        %v1092 = vmul.f32 %v335, %v1089
        %v1093 = vmul.f32 %v336, %v1089
        %v1094 = vmul.f32 %v337, %v1089
        %v1095 = vmul.f32 %v338, %v1089
        %v1096 = vmul.f32 %v339, %v1089
        %v1097 = vmul.f32 %v340, %v1089
        %v1098 = vmul.f32 %v341, %v1089
        %v1099 = vmul.f32 %v342, %v1089
        %v1100 = vmul.f32 %v343, %v1089
        %v1101 = vmul.f32 %v344, %v1089
        %v1102 = vmul.f32 %v345, %v1089
        %v1103 = vmul.f32 %v346, %v1089
        %v1104 = vmul.f32 %v347, %v1089
        %v1105 = vmul.f32 %v348, %v1089
        %v1106 = vmul.f32 %v349, %v1089
        %v1107 = vmul.f32 %v350, %v1089
        %v1108 = vmul.f32 %v628, %v1089
        %v1109 = vmul.f32 %v629, %v1089
        %v1110 = vmul.f32 %v630, %v1089
        %v1111 = vmul.f32 %v631, %v1089
        %v1112 = vmul.f32 %v632, %v1089
        %v1113 = vmul.f32 %v633, %v1089
        %v1138 = vrot.slane %v1090, 2
        %v1139 = vrot.slane %v1091, 2
        %v1140 = vsel %vm551, %v1138, %v1139
        %v1141 = vrot.slane %v1092, 2
        %v1142 = vsel %vm551, %v1139, %v1141
        %v1143 = vrot.slane %v1093, 2
        %v1144 = vrot.slane %v1094, 2
        %v1145 = vsel %vm551, %v1143, %v1144
        %v1146 = vrot.slane %v1095, 2
        %v1147 = vsel %vm551, %v1144, %v1146
        %v1148 = vrot.slane %v1096, 2
        %v1149 = vrot.slane %v1097, 2
        %v1150 = vsel %vm551, %v1148, %v1149
        %v1151 = vrot.slane %v1098, 2
        %v1152 = vsel %vm551, %v1149, %v1151
        %v1153 = vrot.slane %v1099, 2
        %v1154 = vrot.slane %v1100, 2
        %v1155 = vsel %vm551, %v1153, %v1154
        %v1156 = vrot.slane %v1101, 2
        %v1157 = vsel %vm551, %v1154, %v1156
        %v1158 = vrot.slane %v1102, 2
        %v1159 = vrot.slane %v1103, 2
        %v1160 = vsel %vm551, %v1158, %v1159
        %v1161 = vrot.slane %v1104, 2
        %v1162 = vsel %vm551, %v1159, %v1161
        %v1163 = vrot.slane %v1105, 2
        %v1164 = vrot.slane %v1106, 2
        %v1165 = vsel %vm551, %v1163, %v1164
        %v1166 = vrot.slane %v1107, 2
        %v1167 = vsel %vm551, %v1164, %v1166
        %v1168 = vrot.slane %v1108, 2
        %v1169 = vrot.slane %v1109, 2
        %v1170 = vsel %vm551, %v1168, %v1169
        %v1171 = vrot.slane %v1110, 2
        %v1172 = vsel %vm551, %v1169, %v1171
        %v1173 = vrot.slane %v1111, 2
        %v1174 = vrot.slane %v1112, 2
        %v1175 = vsel %vm551, %v1173, %v1174
        %v1176 = vrot.slane %v1113, 2
        %v1177 = vsel %vm551, %v1174, %v1176
        %v1194 = vadd.f32 %v1069, %v1140
        %v1195 = vadd.f32 %v1070, %v1142
        %v1196 = vadd.f32 %v1071, %v1145
        %v1197 = vadd.f32 %v1072, %v1147
        %v1198 = vadd.f32 %v1073, %v1150
        %v1199 = vadd.f32 %v1074, %v1152
        %v1200 = vadd.f32 %v1075, %v1155
        %v1201 = vadd.f32 %v1076, %v1157
        %v1202 = vadd.f32 %v1077, %v1160
        %v1203 = vadd.f32 %v1078, %v1162
        %v1204 = vadd.f32 %v1079, %v1165
        %v1205 = vadd.f32 %v1080, %v1167
        %v1206 = vadd.f32 %v1081, %v1170
        %v1207 = vadd.f32 %v1082, %v1172
        %v1208 = vadd.f32 %v1083, %v1175
        %v1209 = vadd.f32 %v1084, %v1177
        %v1210 = vpack.c.bf16 %v1195, %v1194
        %v1211 = vpack.c.bf16 %v1197, %v1196
        %v1212 = vpack.c.bf16 %v1199, %v1198
        %v1213 = vpack.c.bf16 %v1201, %v1200
        %v1214 = vpack.c.bf16 %v1203, %v1202
        %v1215 = vpack.c.bf16 %v1205, %v1204
        %v1216 = vpack.c.bf16 %v1207, %v1206
        %v1217 = vpack.c.bf16 %v1209, %v1208
        %v1218 = vld [vmem:[%s3] sm:$0xf]
        %v1219 = vld [vmem:[%s3 + $0x4] sm:$0xf]
        %v1220 = vld [vmem:[%s3 + $0x8] sm:$0xf]
        %v1221 = vld [vmem:[%s3 + $0xc] sm:$0xf]
        %v1222 = vld [vmem:[%s3 + $0x10] sm:$0xf]
        %v1223 = vld [vmem:[%s3 + $0x14] sm:$0xf]
        %v1224 = vld [vmem:[%s3 + $0x18] sm:$0xf]
        %v1225 = vld [vmem:[%s3 + $0x1c] sm:$0xf]
        %v1226 = vld [vmem:[%s3 + $0x20] sm:$0xf]
        %v1227 = vld [vmem:[%s3 + $0x24] sm:$0xf]
        %v1228 = vld [vmem:[%s3 + $0x28] sm:$0xf]
        %v1229 = vld [vmem:[%s3 + $0x2c] sm:$0xf]
        %v1230 = vld [vmem:[%s3 + $0x30] sm:$0xf]
        %v1231 = vld [vmem:[%s3 + $0x34] sm:$0xf]
        %v1232 = vld [vmem:[%s3 + $0x38] sm:$0xf]
        %v1233 = vld [vmem:[%s3 + $0x3c] sm:$0xf]
        %v1234 = vld [vmem:[%s4] sm:$0x1]
        %v1236 = vlaneseq
        %v1237 = vshrl.u32 %v1236, 7
        %v1238 = vsub.s32 0, %v1237
        %v1239 = vrot.slane %v1234, %v1238
        %v1257 = vunpack.c.l.b16 %v1218
        %v1258 = vunpack.c.l.b16 %v1219
        %v1259 = vunpack.c.l.b16 %v1220
        %v1260 = vunpack.c.l.b16 %v1221
        %v1261 = vunpack.c.l.b16 %v1222
        %v1262 = vunpack.c.l.b16 %v1223
        %v1263 = vunpack.c.l.b16 %v1224
        %v1264 = vunpack.c.l.b16 %v1225
        %v1265 = vunpack.c.l.b16 %v1226
        %v1266 = vunpack.c.l.b16 %v1227
        %v1267 = vunpack.c.l.b16 %v1228
        %v1268 = vunpack.c.l.b16 %v1229
        %v1269 = vunpack.c.l.b16 %v1230
        %v1270 = vunpack.c.l.b16 %v1231
        %v1271 = vunpack.c.l.b16 %v1232
        %v1272 = vunpack.c.l.b16 %v1233
        %v1273 = vpack.c.b16 %v1258, %v1257
        %v1274 = vpack.c.b16 %v1260, %v1259
        %v1275 = vpack.c.b16 %v1262, %v1261
        %v1276 = vpack.c.b16 %v1264, %v1263
        %v1277 = vpack.c.b16 %v1266, %v1265
        %v1278 = vpack.c.b16 %v1268, %v1267
        %v1279 = vpack.c.b16 %v1270, %v1269
        %v1280 = vpack.c.b16 %v1272, %v1271
        %1289 = vmatprep.subr.bf16.mxu0 0
        %1290 = vmatpush1.bf16.msra.mxu0 %v1273
        %1291 = vmatprep.subr.bf16.mxu0 0
        %1292 = vmatpush1.bf16.msra.mxu0 %v1274
        %1293 = vmatprep.subr.bf16.mxu0 0
        %1294 = vmatpush1.bf16.msra.mxu0 %v1275
        %1295 = vmatprep.subr.bf16.mxu0 0
        %1296 = vmatpush1.bf16.msra.mxu0 %v1276
        %1297 = vmatprep.subr.bf16.mxu0 0
        %1298 = vmatpush1.bf16.msra.mxu0 %v1277
        %1299 = vmatprep.subr.bf16.mxu0 0
        %1300 = vmatpush1.bf16.msra.mxu0 %v1278
        %1301 = vmatprep.subr.bf16.mxu0 0
        %1302 = vmatpush1.bf16.msra.mxu0 %v1279
        %1303 = vmatprep.subr.bf16.mxu0 0
        %1304 = vmatpush1.bf16.msra.mxu0 %v1280
        %1305 = vmatprep.subr.bf16.mxu0 0
        %1306 = vmatpush1.bf16.msra.mxu0 0
        %1307 = vmatprep.subr.bf16.mxu0 0
        %1308 = vmatpush1.bf16.msra.mxu0 0
        %1309 = vmatprep.subr.bf16.mxu0 0
        %1310 = vmatpush1.bf16.msra.mxu0 0
        %1311 = vmatprep.subr.bf16.mxu0 0
        %1312 = vmatpush1.bf16.msra.mxu0 0
        %1313 = vmatprep.subr.bf16.mxu0 0
        %1314 = vmatpush1.bf16.msra.mxu0 0
        %1315 = vmatprep.subr.bf16.mxu0 0
        %1316 = vmatpush1.bf16.msra.mxu0 0
        %1317 = vmatprep.subr.bf16.mxu0 0
        %1318 = vmatpush1.bf16.msra.mxu0 0
        %1319 = vmatprep.subr.bf16.mxu0 0
        %1320 = vmatpush1.bf16.msra.mxu0 0
        %1321 = vmatprep.mubr.bf16.mxu0 0
        %1322 = vmatmul.mubr.bf16.gmra.mrb[0].mxu0 %v1210
        %v1323 = vpop.f32.mrb[0].mxu0
        %v1324 = vadd.f32 %v1239, %v1323
        %v1325 = vpop.f32.mrb[0].mxu0
        %v1326 = vpop.f32.mrb[0].mxu0
        %v1327 = vadd.f32 %v1239, %v1326
        %v1328 = vpop.f32.mrb[0].mxu0
        %1329 = vmatprep.mubr.bf16.mxu0 0
        %1330 = vmatmul.mubr.bf16.gmra.mrb[0].mxu0 %v1211
        %v1331 = vpop.f32.mrb[0].mxu0
        %v1332 = vadd.f32 %v1239, %v1331
        %v1333 = vpop.f32.mrb[0].mxu0
        %v1334 = vpop.f32.mrb[0].mxu0
        %v1335 = vadd.f32 %v1239, %v1334
        %v1336 = vpop.f32.mrb[0].mxu0
        %1337 = vmatprep.mubr.bf16.mxu0 0
        %1338 = vmatmul.mubr.bf16.gmra.mrb[0].mxu0 %v1212
        %v1339 = vpop.f32.mrb[0].mxu0
        %v1340 = vadd.f32 %v1239, %v1339
        %v1341 = vpop.f32.mrb[0].mxu0
        %v1342 = vpop.f32.mrb[0].mxu0
        %v1343 = vadd.f32 %v1239, %v1342
        %v1344 = vpop.f32.mrb[0].mxu0
        %1345 = vmatprep.mubr.bf16.mxu0 0
        %1346 = vmatmul.mubr.bf16.gmra.mrb[0].mxu0 %v1213
        %v1347 = vpop.f32.mrb[0].mxu0
        %v1348 = vadd.f32 %v1239, %v1347
        %v1349 = vpop.f32.mrb[0].mxu0
        %v1350 = vpop.f32.mrb[0].mxu0
        %v1351 = vadd.f32 %v1239, %v1350
        %v1352 = vpop.f32.mrb[0].mxu0
        %1353 = vmatprep.mubr.bf16.mxu0 0
        %1354 = vmatmul.mubr.bf16.gmra.mrb[0].mxu0 %v1214
        %v1355 = vpop.f32.mrb[0].mxu0
        %v1356 = vadd.f32 %v1239, %v1355
        %v1357 = vpop.f32.mrb[0].mxu0
        %v1358 = vpop.f32.mrb[0].mxu0
        %v1359 = vadd.f32 %v1239, %v1358
        %v1360 = vpop.f32.mrb[0].mxu0
        %1361 = vmatprep.mubr.bf16.mxu0 0
        %1362 = vmatmul.mubr.bf16.gmra.mrb[0].mxu0 %v1215
        %v1363 = vpop.f32.mrb[0].mxu0
        %v1364 = vadd.f32 %v1239, %v1363
        %v1365 = vpop.f32.mrb[0].mxu0
        %v1366 = vpop.f32.mrb[0].mxu0
        %v1367 = vadd.f32 %v1239, %v1366
        %v1368 = vpop.f32.mrb[0].mxu0
        %1369 = vmatprep.mubr.bf16.mxu0 0
        %1370 = vmatmul.mubr.bf16.gmra.mrb[0].mxu0 %v1216
        %v1371 = vpop.f32.mrb[0].mxu0
        %v1372 = vadd.f32 %v1239, %v1371
        %v1373 = vpop.f32.mrb[0].mxu0
        %v1374 = vpop.f32.mrb[0].mxu0
        %v1375 = vadd.f32 %v1239, %v1374
        %v1376 = vpop.f32.mrb[0].mxu0
        %1377 = vmatprep.mubr.bf16.mxu0 0
        %1378 = vmatmul.mubr.bf16.gmra.mrb[0].mxu0 %v1217
        %v1379 = vpop.f32.mrb[0].mxu0
        %v1380 = vadd.f32 %v1239, %v1379
        %v1381 = vpop.f32.mrb[0].mxu0
        %v1382 = vpop.f32.mrb[0].mxu0
        %v1383 = vadd.f32 %v1239, %v1382
        %v1384 = vpop.f32.mrb[0].mxu0
        %1385 = vdwg.mxu0
        %v1386 = vmax.f32 %v1324, 0.0
        %v1387 = vmax.f32 %v1327, 0.0
        %v1388 = vmax.f32 %v1332, 0.0
        %v1389 = vmax.f32 %v1335, 0.0
        %v1390 = vmax.f32 %v1340, 0.0
        %v1391 = vmax.f32 %v1343, 0.0
        %v1392 = vmax.f32 %v1348, 0.0
        %v1393 = vmax.f32 %v1351, 0.0
        %v1394 = vmax.f32 %v1356, 0.0
        %v1395 = vmax.f32 %v1359, 0.0
        %v1396 = vmax.f32 %v1364, 0.0
        %v1397 = vmax.f32 %v1367, 0.0
        %v1398 = vmax.f32 %v1372, 0.0
        %v1399 = vmax.f32 %v1375, 0.0
        %v1400 = vmax.f32 %v1380, 0.0
        %v1401 = vmax.f32 %v1383, 0.0
        %1402 = vst [vmem:[%s233] sm:$0xff] %v1386
        %1403 = vst [vmem:[%s233 + $0x8] sm:$0xff] %v1387
        %1404 = vst [vmem:[%s233 + $0x10] sm:$0xff] %v1388
        %1405 = vst [vmem:[%s233 + $0x18] sm:$0xff] %v1389
        %1406 = vst [vmem:[%s233 + $0x20] sm:$0xff] %v1390
        %1407 = vst [vmem:[%s233 + $0x28] sm:$0xff] %v1391
        %1408 = vst [vmem:[%s233 + $0x30] sm:$0xff] %v1392
        %1409 = vst [vmem:[%s233 + $0x38] sm:$0xff] %v1393
        %1410 = vst [vmem:[%s233 + $0x40] sm:$0xff] %v1394
        %1411 = vst [vmem:[%s233 + $0x48] sm:$0xff] %v1395
        %1412 = vst [vmem:[%s233 + $0x50] sm:$0xff] %v1396
        %1413 = vst [vmem:[%s233 + $0x58] sm:$0xff] %v1397
        %1414 = vst [vmem:[%s233 + $0x60] sm:$0xff] %v1398
        %1415 = vst [vmem:[%s233 + $0x68] sm:$0xff] %v1399
        %1416 = vst [vmem:[%s233 + $0x70] sm:$0xff] %v1400
        %1417 = vst [vmem:[%s233 + $0x78] sm:$0xff] %v1401
        %s1418 = sand.u32 %s132, 1
        %s1419 = scalar_lea.sflag [#allocation5], %s1418
        %s1420 = sand.u32 %s132, 1
        %s1421 = smul.addr %s1420, 128
        %s1422 = scalar_lea.vmem [#allocation4], %s1421
        // Predicated region
        $region74: #{tpu_custom_call.1} parent=35 // pred_check
          %p1423 = pneg %p142
        $region75: #{tpu_custom_call.1} parent=35 // pred_check_branch
          %1425 = sbr.rel (%p1423) target = $region77
        $region76: #{tpu_custom_call.1} parent=35 // pred_region
          %s1426 = smul.u32 8, %s24
          %s1428 = ssub.s32 2048, 2048
          %1429 = vsyncadd %s1419, %s1428
          %s1430 = smul.addr %s1426, 2
          %s1431 = smul.addr %s23, 32
          %s1432 = sadd.s32 %s1430, %s1431
          %s1433 = smul.addr %s1432, 128
          %s1434 = scalar_lea.hbm %s5, %s1433
          %s1435 = sshll.u32 %s1422, 4
          %s1436 = int_to_ptr.vmem [resolvable:$true] %s1435
          %1441 = dma.vmem_to_hbm [thread:$0]  %s1436, 2048, %s1434, %s1419, 128, 128, 8
        $region77: #{tpu_custom_call.1} parent=35 // pred_fallthru
          _
      $region36: #{tpu_custom_call.1} parent=5 // pred_fallthru
        _
      %p1442 = scmp.le.s32.totalorder 2, %s14
      // Predicated region
      $region78: #{tpu_custom_call.1} parent=5 // pred_check
        %p1443 = pneg %p1442
      $region79: #{tpu_custom_call.1} parent=5 // pred_check_branch
        %1445 = sbr.rel (%p1443) target = $region81
      $region80: #{tpu_custom_call.1} parent=5 // pred_region
        %s1446 = ssub.s32 %s14, 2
        // Predicated region
        $region82: #{tpu_custom_call.1} parent=80 // pred_check
          %p1447 = pneg %p148
        $region83: #{tpu_custom_call.1} parent=80 // pred_check_branch
          %1449 = sbr.rel (%p1447) target = $region85
        $region84: #{tpu_custom_call.1} parent=80 // pred_region
          %s1450 = sand.u32 %s133, 1
          %s1451 = scalar_lea.sflag [#allocation5], %s1450
          %s1452 = sand.u32 %s133, 1
          %s1453 = smul.addr %s1452, 128
          %s1454 = scalar_lea.vmem [#allocation4], %s1453
          %1455 = dma.done %s1451, 2048
        $region85: #{tpu_custom_call.1} parent=80 // pred_fallthru
          _
      $region81: #{tpu_custom_call.1} parent=5 // pred_fallthru
        _
    $region6: #{tpu_custom_call.1} parent=1 // loop_footer
      %s18 = sadd.s32 1, %s14
    $region7: #{tpu_custom_call.1} parent=1 // loop_footer_branch
      %13 = sbr.rel target = $region3
    $region8: #{tpu_custom_call.1} parent=1 // loop_exit
      _
    %1456 = vsyncpa [#allocation5], 1
    %s1457 = scalar_lea.sflag [#allocation5], 1
    %1458 = vsyncpa %s1457, 1
  %1459 = vsyncmov [#allocation3]
  %s1460 = vpop.sfrf %1459
  %p1461 = scmp.eq.s32.totalorder %s1460, 0
  %p1462 = pneg %p1461
  %1464 = shalt.err (%p1462)

</llo_original>
